<compile_context>
chip_gen: v6e
topology: v6e:2x2x1
jax: 0.10.0
libtpu: 0.0.40
codegen_flags: <defaults>
</compile_context>

<pallas_src>
import jax
import jax.numpy as jnp
from jax.experimental import pallas as pl
from jax.experimental.pallas import tpu as pltpu


# ------------------------------ helpers --------------------------------------

def _round_up(n, m):
    return (n + m - 1) // m * m


def _vmem_limit_bytes():
    """~3/4 of physical VMEM (generation-aware), capped at 96 MiB."""
    cap = 128 * 1024 * 1024
    try:
        cap = int(getattr(pltpu.get_tpu_info(), "vmem_capacity_bytes", cap))
    except Exception:
        pass
    return int(min(cap * 3 // 4, 96 * 1024 * 1024))


def _compiler_params(dims):
    return pltpu.CompilerParams(dimension_semantics=dims,
                                vmem_limit_bytes=_vmem_limit_bytes())


def _pick_tiles(n_pad):
    """Decoupled (tm, tk) for the tiled path.

    tk (A's lane / contraction axis) is grown toward 2048; tm (rows, 'parallel')
    toward 512 but reduced (never below 256) to keep >= 4 row blocks so both
    v7x TensorCores get work.
    """
    tk = 128
    for cand in (2048, 1024, 512, 256):
        if n_pad % cand == 0:
            tk = cand
            break
    tm = 512 if n_pad % 512 == 0 else 128
    while tm > 256 and n_pad // tm < 4 and n_pad % (tm // 2) == 0:
        tm //= 2
    return min(tm, n_pad), min(tk, n_pad)


# --------------------------- Pallas kernels ----------------------------------

def _gcn_layer_kernel(x_ref, a_ref, w_ref, b_ref, o_ref, acc_ref):
    """o = relu(A @ (X @ W) + b), K-blocked with an f32 scratch accumulator.

    grid = (row blocks i [parallel], K blocks k [arbitrary]).
    X@W is recomputed per row block (fused): the (N, E) HW intermediate never
    touches HBM, and the recompute is ~F_in/tm extra MXU work (free slack in a
    mem-bound regime).
    """
    @pl.when(pl.program_id(1) == 0)
    def _():
        acc_ref[...] = jnp.zeros_like(acc_ref)

    hw = jnp.dot(x_ref[...], w_ref[...],
                 preferred_element_type=jnp.float32).astype(jnp.bfloat16)  # (tk, E)
    acc_ref[...] += jnp.dot(a_ref[...], hw, preferred_element_type=jnp.float32)

    @pl.when(pl.program_id(1) == pl.num_programs(1) - 1)
    def _():
        # bias-add / ReLU in f32 (v5e has no bf16 VALU).  Padded rows become
        # relu(b); pooling masks are zero there so results stay correct.
        o_ref[...] = jnp.maximum(acc_ref[...] + b_ref[...], 0.0).astype(o_ref.dtype)


def _pool_head_kernel(mmean_ref, maskt_ref, h_ref, wout_ref, bout_ref,
                      out_ref, hid_ref, gmean_ref, gmax_ref):
    """Global mean/max pool over node blocks + Linear + Sigmoid head."""
    k = pl.program_id(0)

    @pl.when(k == 0)
    def _():
        gmean_ref[...] = jnp.zeros_like(gmean_ref)
        gmax_ref[...] = jnp.zeros_like(gmax_ref)      # h >= 0 post-ReLU

    h_f32 = h_ref[...].astype(jnp.float32)            # (tk, E)

    # mean pool: 1/cnt already folded into mmean by the wrapper -> one MXU matmul.
    gmean_ref[...] += jnp.dot(mmean_ref[...], h_f32,
                              preferred_element_type=jnp.float32)

    # max pool: since h >= 0, masking is a multiply (no -1e30 sentinel / select).
    maskt = maskt_ref[...]                            # (tk, G), pre-transposed
    g_cnt = maskt.shape[1]
    blk = [jnp.max(h_f32 * maskt[:, g:g + 1], axis=0, keepdims=True)
           for g in range(g_cnt)]
    gmax_ref[...] = jnp.maximum(gmax_ref[...], jnp.concatenate(blk, axis=0))

    @pl.when(k == pl.num_programs(0) - 1)
    def _():
        hidden = jnp.concatenate([gmax_ref[...], gmean_ref[...]], axis=1)  # (G, 2E)
        hid_ref[...] = hidden
        logits = jnp.dot(hidden, wout_ref[...],
                         preferred_element_type=jnp.float32) + bout_ref[...]
        out_ref[...] = 1.0 / (1.0 + jnp.exp(-logits))


def _fused_small_kernel(x_ref, a_ref, mmean_ref, maskt_ref,
                        w0_ref, b0_ref, w1_ref, b1_ref, w2_ref, b2_ref,
                        wout_ref, bout_ref, out_ref, hid_ref):
    """Whole forward (3 GCN layers + pooling + head) with A and H resident in VMEM."""
    a = a_ref[...]                                    # (N, N)  bf16
    h = x_ref[...]                                    # (N, F)  bf16
    for w_ref, b_ref in ((w0_ref, b0_ref), (w1_ref, b1_ref), (w2_ref, b2_ref)):
        hw = jnp.dot(h, w_ref[...],
                     preferred_element_type=jnp.float32).astype(jnp.bfloat16)
        h = jnp.maximum(jnp.dot(a, hw, preferred_element_type=jnp.float32)
                        + b_ref[...], 0.0).astype(jnp.bfloat16)

    h_f32 = h.astype(jnp.float32)
    gmean = jnp.dot(mmean_ref[...], h_f32, preferred_element_type=jnp.float32)
    maskt = maskt_ref[...]                            # (N, G)
    g_cnt = maskt.shape[1]
    gmax = jnp.concatenate(
        [jnp.max(h_f32 * maskt[:, g:g + 1], axis=0, keepdims=True)
         for g in range(g_cnt)], axis=0)              # (G, E), h >= 0 so 0-floor ok
    hidden = jnp.concatenate([gmax, gmean], axis=1)   # (G, 2E)
    hid_ref[...] = hidden
    logits = jnp.dot(hidden, wout_ref[...],
                     preferred_element_type=jnp.float32) + bout_ref[...]
    out_ref[...] = 1.0 / (1.0 + jnp.exp(-logits))


# --------------------------- pallas_call wrappers -----------------------------

def _gcn_layer_call(a, x, w, b, tm, tk):
    n = a.shape[0]
    f_in = x.shape[1]
    e = w.shape[1]
    return pl.pallas_call(
        _gcn_layer_kernel,
        out_shape=jax.ShapeDtypeStruct((n, e), jnp.bfloat16),
        grid=(n // tm, n // tk),
        in_specs=[pl.BlockSpec((tk, f_in), lambda i, k: (k, 0)),   # X block
                  pl.BlockSpec((tm, tk), lambda i, k: (i, k)),     # A block (dominant stream)
                  pl.BlockSpec((f_in, e), lambda i, k: (0, 0)),    # W resident
                  pl.BlockSpec((1, e), lambda i, k: (0, 0))],      # bias
        out_specs=pl.BlockSpec((tm, e), lambda i, k: (i, 0)),
        scratch_shapes=[pltpu.VMEM((tm, e), jnp.float32)],
        compiler_params=_compiler_params(("parallel", "arbitrary")),
    )(x, a, w, b)


def _pool_call(mask_mean, mask_t, h, wout, bout, tk):
    g_cnt, n = mask_mean.shape
    e = h.shape[1]
    return pl.pallas_call(
        _pool_head_kernel,
        out_shape=(jax.ShapeDtypeStruct((g_cnt, 1), jnp.float32),
                   jax.ShapeDtypeStruct((g_cnt, 2 * e), jnp.float32)),
        grid=(n // tk,),
        in_specs=[pl.BlockSpec((g_cnt, tk), lambda k: (0, k)),
                  pl.BlockSpec((tk, g_cnt), lambda k: (k, 0)),
                  pl.BlockSpec((tk, e), lambda k: (k, 0)),
                  pl.BlockSpec((2 * e, 1), lambda k: (0, 0)),
                  pl.BlockSpec((1, 1), lambda k: (0, 0))],
        out_specs=(pl.BlockSpec((g_cnt, 1), lambda k: (0, 0)),
                   pl.BlockSpec((g_cnt, 2 * e), lambda k: (0, 0))),
        scratch_shapes=[pltpu.VMEM((g_cnt, e), jnp.float32),
                        pltpu.VMEM((g_cnt, e), jnp.float32)],
        compiler_params=_compiler_params(("arbitrary",)),
    )(mask_mean, mask_t, h, wout, bout)


def _fused_small_call(a, x, mmean, maskt, ws, bs, wout, bout):
    g_cnt = mmean.shape[0]
    e = ws[0].shape[1]
    return pl.pallas_call(
        _fused_small_kernel,
        out_shape=(jax.ShapeDtypeStruct((g_cnt, 1), jnp.float32),
                   jax.ShapeDtypeStruct((g_cnt, 2 * e), jnp.float32)),
        compiler_params=pltpu.CompilerParams(vmem_limit_bytes=_vmem_limit_bytes()),
    )(x, a, mmean, maskt, ws[0], bs[0], ws[1], bs[1], ws[2], bs[2], wout, bout)


# --------------------------- graph preprocessing ------------------------------

def gcn_normalized_adjacency(edge_index, edge_weight, num_nodes):
    """Dense GCN-normalized adjacency with self loops (PyG gcn_norm semantics)."""
    src = edge_index[0]
    dst = edge_index[1]
    A = jnp.zeros((num_nodes, num_nodes), jnp.float32)
    A = A.at[dst, src].add(edge_weight.astype(jnp.float32))     # A[dst, src] = w
    A = A + jnp.eye(num_nodes, dtype=jnp.float32)               # self loops
    deg = jnp.sum(A, axis=1)
    d_inv_sqrt = jnp.where(deg > 0, jax.lax.rsqrt(deg), 0.0)
    return d_inv_sqrt[:, None] * A * d_inv_sqrt[None, :]


def precompute_graph(edge_index, edge_weight, batch_index, num_nodes,
                     num_graphs, n_pad):
    """Graph-static tensors, built ONCE and reused across forward calls.

    A_hat is cast to bf16 BEFORE padding (halves the wrapper-side HBM copy);
    the mean-pool mask carries 1/cnt so the kernels never divide; the max-pool
    mask is pre-transposed to (N, G) so the kernels never transpose.
    """
    pad = n_pad - num_nodes
    a_hat = gcn_normalized_adjacency(edge_index, edge_weight, num_nodes)
    a_bf = jnp.pad(a_hat.astype(jnp.bfloat16), ((0, pad), (0, pad)))
    mask = (batch_index[None, :] == jnp.arange(num_graphs)[:, None]).astype(jnp.float32)
    cnt = jnp.sum(mask, axis=1, keepdims=True)
    mask_mean = jnp.pad(mask / jnp.maximum(cnt, 1.0), ((0, 0), (0, pad)))   # (G, N_pad)
    mask_t = jnp.pad(mask.T, ((0, pad), (0, 0)))                            # (N_pad, G)
    return a_bf, mask_mean, mask_t


# ------------------------------- forward --------------------------------------

def two_layer_simple_gcn(x, a_bf, mask_mean, mask_t, params, *, force_tiled=False):
    """Forward pass.  a_bf / mask_* come from precompute_graph (graph-static)."""
    n_pad = a_bf.shape[0]
    pad = n_pad - x.shape[0]
    x_p = jnp.pad(x, ((0, pad), (0, 0))).astype(jnp.bfloat16)

    ws = [params[f"w{l}"].astype(jnp.bfloat16) for l in range(3)]
    bs = [params[f"b{l}"] for l in range(3)]                      # f32

    if not force_tiled and n_pad <= 1024:
        # Small problem: one pallas_call, A and H resident in VMEM.
        return _fused_small_call(a_bf, x_p, mask_mean, mask_t,
                                 ws, bs, params["wout"], params["bout"])

    # Large problem: 3 fused GCN-layer calls (A streamed, XW fused) + pool/head.
    tm, tk = _pick_tiles(n_pad)
    h = x_p
    for l in range(3):                        # initial_conv, conv1, conv2 (+ ReLU)
        h = _gcn_layer_call(a_bf, h, ws[l], bs[l], tm, tk)
    return _pool_call(mask_mean, mask_t, h, params["wout"], params["bout"], tk)


def init_params(key, num_features, embedding_size):
    ks = jax.random.split(key, 4)

    def glorot(k, shape):
        fan_in, fan_out = shape
        limit = jnp.sqrt(6.0 / (fan_in + fan_out))
        return jax.random.uniform(k, shape, jnp.float32, -limit, limit)

    return {
        "w0": glorot(ks[0], (num_features, embedding_size)),
        "b0": jnp.zeros((1, embedding_size), jnp.float32),
        "w1": glorot(ks[1], (embedding_size, embedding_size)),
        "b1": jnp.zeros((1, embedding_size), jnp.float32),
        "w2": glorot(ks[2], (embedding_size, embedding_size)),
        "b2": jnp.zeros((1, embedding_size), jnp.float32),
        "wout": glorot(ks[3], (2 * embedding_size, 1)),
        "bout": jnp.zeros((1, 1), jnp.float32),
    }


# --------------------------- pure-JAX f32 reference ---------------------------

def reference_forward(x, a_hat, batch_index, params, num_graphs):
    h = x
    for l in range(3):
        h = jnp.maximum(a_hat @ (h @ params[f"w{l}"]) + params[f"b{l}"], 0.0)
    mask = (batch_index[None, :] == jnp.arange(num_graphs)[:, None]).astype(jnp.float32)
    cnt = jnp.maximum(jnp.sum(mask, axis=1, keepdims=True), 1.0)
    gmean = (mask @ h) / cnt
    gmax = jnp.max(jnp.where(mask[:, :, None] > 0, h[None, :, :], -jnp.inf), axis=1)
    gmax = jnp.where(jnp.isfinite(gmax), gmax, 0.0)
    hidden = jnp.concatenate([gmax, gmean], axis=1)
    out = jax.nn.sigmoid(hidden @ params["wout"] + params["bout"])
    return out, hidden


# --------------------------------- main ----------------------------------------

if __name__ == "__main__":
    key = jax.random.PRNGKey(0)
    k_x, k_w, k_p = jax.random.split(key, 3)

    # 4 graphs x 64 nodes -> N=256, F=16, E=64 (hidden = 128 lanes).
    num_graphs = 4
    nodes_per_graph = 64
    N = num_graphs * nodes_per_graph
    num_features = 16
    embedding_size = 64

    x = jax.random.normal(k_x, (N, num_features), jnp.float32)
    batch_index = jnp.repeat(jnp.arange(num_graphs, dtype=jnp.int32),
                             nodes_per_graph)

    # deterministic bidirectional ring edges within each graph
    src_list, dst_list = [], []
    for g in range(num_graphs):
        base = g * nodes_per_graph
        for i in range(nodes_per_graph):
            a_n = base + i
            b_n = base + (i + 1) % nodes_per_graph
            src_list += [a_n, b_n]
            dst_list += [b_n, a_n]
    edge_index = jnp.array([src_list, dst_list], dtype=jnp.int32)   # (2, 512)
    edge_weight = jax.random.uniform(k_w, (edge_index.shape[1],),
                                     jnp.float32, 0.5, 1.5)

    params = init_params(k_p, num_features, embedding_size)

    # graph-static preprocessing: done once, reused by every forward call.
    n_pad = _round_up(N, 128)
    a_bf, mask_mean, mask_t = precompute_graph(edge_index, edge_weight,
                                               batch_index, N, num_graphs, n_pad)

    fwd_fused = jax.jit(lambda x_, a_, mm_, mt_, p_:
                        two_layer_simple_gcn(x_, a_, mm_, mt_, p_, force_tiled=False))
    fwd_tiled = jax.jit(lambda x_, a_, mm_, mt_, p_:
                        two_layer_simple_gcn(x_, a_, mm_, mt_, p_, force_tiled=True))

    out_f, hid_f = fwd_fused(x, a_bf, mask_mean, mask_t, params)   # single-kernel path
    out_t, hid_t = fwd_tiled(x, a_bf, mask_mean, mask_t, params)   # tiled path
    jax.block_until_ready((out_f, hid_f, out_t, hid_t))

    # pure-JAX f32 reference (loose tolerance: kernels use bf16 MXU operands)
    a_hat_f32 = gcn_normalized_adjacency(edge_index, edge_weight, N)
    out_r, hid_r = reference_forward(x, a_hat_f32, batch_index, params, num_graphs)

    assert out_f.shape == (num_graphs, 1)
    assert hid_f.shape == (num_graphs, 2 * embedding_size)
    for o, h in ((out_f, hid_f), (out_t, hid_t)):
        assert bool(jnp.all(jnp.isfinite(h)))
        assert bool(jnp.all((o >= 0.0) & (o <= 1.0)))
        assert float(jnp.max(jnp.abs(o - out_r))) < 5e-2
        assert float(jnp.max(jnp.abs(h - hid_r))) < 8e-2
    assert float(jnp.max(jnp.abs(hid_f - hid_t))) < 8e-2

    print("KERNEL_OK")
</pallas_src>

<mosaic_0001>
module attributes {stable_mosaic.version = 11 : i64} {
  func.func @_fused_small_kernel(%arg0: memref<256x16xbf16, #tpu.memory_space<vmem>>, %arg1: memref<256x256xbf16, #tpu.memory_space<vmem>>, %arg2: memref<4x256xf32, #tpu.memory_space<vmem>>, %arg3: memref<256x4xf32, #tpu.memory_space<vmem>>, %arg4: memref<16x64xbf16, #tpu.memory_space<vmem>>, %arg5: memref<1x64xf32, #tpu.memory_space<vmem>>, %arg6: memref<64x64xbf16, #tpu.memory_space<vmem>>, %arg7: memref<1x64xf32, #tpu.memory_space<vmem>>, %arg8: memref<64x64xbf16, #tpu.memory_space<vmem>>, %arg9: memref<1x64xf32, #tpu.memory_space<vmem>>, %arg10: memref<128x1xf32, #tpu.memory_space<vmem>>, %arg11: memref<1x1xf32, #tpu.memory_space<vmem>>, %arg12: memref<4x1xf32, #tpu.memory_space<vmem>>, %arg13: memref<4x128xf32, #tpu.memory_space<vmem>>) attributes {dimension_semantics = [], scalar_prefetch = 0 : i64, scratch_operands = 0 : i64, tpu.core_type = #tpu.core_type<tc>} {
    %c0 = arith.constant 0 : index
    %c0_0 = arith.constant 0 : index
    %0 = vector.load %arg1[%c0, %c0_0] : memref<256x256xbf16, #tpu.memory_space<vmem>>, vector<256x256xbf16>
    %c0_1 = arith.constant 0 : index
    %c0_2 = arith.constant 0 : index
    %1 = vector.load %arg0[%c0_1, %c0_2] : memref<256x16xbf16, #tpu.memory_space<vmem>>, vector<256x16xbf16>
    %c0_3 = arith.constant 0 : index
    %c0_4 = arith.constant 0 : index
    %2 = vector.load %arg4[%c0_3, %c0_4] : memref<16x64xbf16, #tpu.memory_space<vmem>>, vector<16x64xbf16>
    %cst = arith.constant dense<0.000000e+00> : vector<256x64xf32>
    %3 = tpu.matmul %1, %2, %cst {dimension_numbers = #tpu.dot_dimension_numbers<[1], [0], [0], [1], [0, 0, 1, 1], [], []>} : vector<256x16xbf16>, vector<16x64xbf16>, vector<256x64xf32> -> vector<256x64xf32>
    %4 = arith.truncf %3 : vector<256x64xf32> to vector<256x64xbf16>
    %cst_5 = arith.constant dense<0.000000e+00> : vector<256x64xf32>
    %5 = tpu.matmul %0, %4, %cst_5 {dimension_numbers = #tpu.dot_dimension_numbers<[1], [0], [0], [1], [0, 0, 1, 1], [], []>} : vector<256x256xbf16>, vector<256x64xbf16>, vector<256x64xf32> -> vector<256x64xf32>
    %c0_6 = arith.constant 0 : index
    %c0_7 = arith.constant 0 : index
    %6 = vector.load %arg5[%c0_6, %c0_7] : memref<1x64xf32, #tpu.memory_space<vmem>>, vector<1x64xf32>
    %7 = vector.broadcast %6 : vector<1x64xf32> to vector<256x64xf32>
    %8 = arith.addf %5, %7 : vector<256x64xf32>
    %cst_8 = arith.constant 0.000000e+00 : f32
    %9 = vector.broadcast %cst_8 : f32 to vector<256x64xf32>
    %10 = arith.maximumf %8, %9 : vector<256x64xf32>
    %11 = arith.truncf %10 : vector<256x64xf32> to vector<256x64xbf16>
    %c0_9 = arith.constant 0 : index
    %c0_10 = arith.constant 0 : index
    %12 = vector.load %arg6[%c0_9, %c0_10] : memref<64x64xbf16, #tpu.memory_space<vmem>>, vector<64x64xbf16>
    %cst_11 = arith.constant dense<0.000000e+00> : vector<256x64xf32>
    %13 = tpu.matmul %11, %12, %cst_11 {dimension_numbers = #tpu.dot_dimension_numbers<[1], [0], [0], [1], [0, 0, 1, 1], [], []>} : vector<256x64xbf16>, vector<64x64xbf16>, vector<256x64xf32> -> vector<256x64xf32>
    %14 = arith.truncf %13 : vector<256x64xf32> to vector<256x64xbf16>
    %cst_12 = arith.constant dense<0.000000e+00> : vector<256x64xf32>
    %15 = tpu.matmul %0, %14, %cst_12 {dimension_numbers = #tpu.dot_dimension_numbers<[1], [0], [0], [1], [0, 0, 1, 1], [], []>} : vector<256x256xbf16>, vector<256x64xbf16>, vector<256x64xf32> -> vector<256x64xf32>
    %c0_13 = arith.constant 0 : index
    %c0_14 = arith.constant 0 : index
    %16 = vector.load %arg7[%c0_13, %c0_14] : memref<1x64xf32, #tpu.memory_space<vmem>>, vector<1x64xf32>
    %17 = vector.broadcast %16 : vector<1x64xf32> to vector<256x64xf32>
    %18 = arith.addf %15, %17 : vector<256x64xf32>
    %cst_15 = arith.constant 0.000000e+00 : f32
    %19 = vector.broadcast %cst_15 : f32 to vector<256x64xf32>
    %20 = arith.maximumf %18, %19 : vector<256x64xf32>
    %21 = arith.truncf %20 : vector<256x64xf32> to vector<256x64xbf16>
    %c0_16 = arith.constant 0 : index
    %c0_17 = arith.constant 0 : index
    %22 = vector.load %arg8[%c0_16, %c0_17] : memref<64x64xbf16, #tpu.memory_space<vmem>>, vector<64x64xbf16>
    %cst_18 = arith.constant dense<0.000000e+00> : vector<256x64xf32>
    %23 = tpu.matmul %21, %22, %cst_18 {dimension_numbers = #tpu.dot_dimension_numbers<[1], [0], [0], [1], [0, 0, 1, 1], [], []>} : vector<256x64xbf16>, vector<64x64xbf16>, vector<256x64xf32> -> vector<256x64xf32>
    %24 = arith.truncf %23 : vector<256x64xf32> to vector<256x64xbf16>
    %cst_19 = arith.constant dense<0.000000e+00> : vector<256x64xf32>
    %25 = tpu.matmul %0, %24, %cst_19 {dimension_numbers = #tpu.dot_dimension_numbers<[1], [0], [0], [1], [0, 0, 1, 1], [], []>} : vector<256x256xbf16>, vector<256x64xbf16>, vector<256x64xf32> -> vector<256x64xf32>
    %c0_20 = arith.constant 0 : index
    %c0_21 = arith.constant 0 : index
    %26 = vector.load %arg9[%c0_20, %c0_21] : memref<1x64xf32, #tpu.memory_space<vmem>>, vector<1x64xf32>
    %27 = vector.broadcast %26 : vector<1x64xf32> to vector<256x64xf32>
    %28 = arith.addf %25, %27 : vector<256x64xf32>
    %cst_22 = arith.constant 0.000000e+00 : f32
    %29 = vector.broadcast %cst_22 : f32 to vector<256x64xf32>
    %30 = arith.maximumf %28, %29 : vector<256x64xf32>
    %31 = arith.truncf %30 : vector<256x64xf32> to vector<256x64xbf16>
    %32 = arith.extf %31 : vector<256x64xbf16> to vector<256x64xf32>
    %c0_23 = arith.constant 0 : index
    %c0_24 = arith.constant 0 : index
    %33 = vector.load %arg2[%c0_23, %c0_24] : memref<4x256xf32, #tpu.memory_space<vmem>>, vector<4x256xf32>
    %cst_25 = arith.constant dense<0.000000e+00> : vector<4x64xf32>
    %34 = tpu.matmul %33, %32, %cst_25 {dimension_numbers = #tpu.dot_dimension_numbers<[1], [0], [0], [1], [0, 0, 1, 1], [], []>} : vector<4x256xf32>, vector<256x64xf32>, vector<4x64xf32> -> vector<4x64xf32>
    %c0_26 = arith.constant 0 : index
    %c0_27 = arith.constant 0 : index
    %35 = vector.load %arg3[%c0_26, %c0_27] : memref<256x4xf32, #tpu.memory_space<vmem>>, vector<256x4xf32>
    %36 = vector.extract_strided_slice %35 {offsets = [0, 0], sizes = [256, 1], strides = [1, 1]} : vector<256x4xf32> to vector<256x1xf32>
    %37 = vector.broadcast %36 : vector<256x1xf32> to vector<256x64xf32>
    %38 = arith.mulf %32, %37 : vector<256x64xf32>
    %cst_28 = arith.constant dense<0xFF800000> : vector<64xf32>
    %39 = vector.multi_reduction <maximumf>, %38, %cst_28 [0] : vector<256x64xf32> to vector<64xf32>
    %40 = vector.shape_cast %39 : vector<64xf32> to vector<1x64xf32>
    %41 = vector.extract_strided_slice %35 {offsets = [0, 1], sizes = [256, 1], strides = [1, 1]} : vector<256x4xf32> to vector<256x1xf32>
    %42 = vector.broadcast %41 : vector<256x1xf32> to vector<256x64xf32>
    %43 = arith.mulf %32, %42 : vector<256x64xf32>
    %cst_29 = arith.constant dense<0xFF800000> : vector<64xf32>
    %44 = vector.multi_reduction <maximumf>, %43, %cst_29 [0] : vector<256x64xf32> to vector<64xf32>
    %45 = vector.shape_cast %44 : vector<64xf32> to vector<1x64xf32>
    %46 = vector.extract_strided_slice %35 {offsets = [0, 2], sizes = [256, 1], strides = [1, 1]} : vector<256x4xf32> to vector<256x1xf32>
    %47 = vector.broadcast %46 : vector<256x1xf32> to vector<256x64xf32>
    %48 = arith.mulf %32, %47 : vector<256x64xf32>
    %cst_30 = arith.constant dense<0xFF800000> : vector<64xf32>
    %49 = vector.multi_reduction <maximumf>, %48, %cst_30 [0] : vector<256x64xf32> to vector<64xf32>
    %50 = vector.shape_cast %49 : vector<64xf32> to vector<1x64xf32>
    %51 = vector.extract_strided_slice %35 {offsets = [0, 3], sizes = [256, 1], strides = [1, 1]} : vector<256x4xf32> to vector<256x1xf32>
    %52 = vector.broadcast %51 : vector<256x1xf32> to vector<256x64xf32>
    %53 = arith.mulf %32, %52 : vector<256x64xf32>
    %cst_31 = arith.constant dense<0xFF800000> : vector<64xf32>
    %54 = vector.multi_reduction <maximumf>, %53, %cst_31 [0] : vector<256x64xf32> to vector<64xf32>
    %55 = vector.shape_cast %54 : vector<64xf32> to vector<1x64xf32>
    %56 = tpu.concatenate %40, %45, %50, %55 in 0 : vector<1x64xf32>, vector<1x64xf32>, vector<1x64xf32>, vector<1x64xf32> -> vector<4x64xf32>
    %57 = tpu.concatenate %56, %34 in 1 : vector<4x64xf32>, vector<4x64xf32> -> vector<4x128xf32>
    %c0_32 = arith.constant 0 : index
    %c0_33 = arith.constant 0 : index
    %58 = vector.load %arg13[%c0_32, %c0_33] : memref<4x128xf32, #tpu.memory_space<vmem>>, vector<4x128xf32>
    tpu.vector_store %arg13[%c0_32, %c0_33], %57 {strides = array<i32>} : memref<4x128xf32, #tpu.memory_space<vmem>>, vector<4x128xf32>,
    %c0_34 = arith.constant 0 : index
    %c0_35 = arith.constant 0 : index
    %59 = vector.load %arg10[%c0_34, %c0_35] : memref<128x1xf32, #tpu.memory_space<vmem>>, vector<128x1xf32>
    %cst_36 = arith.constant dense<0.000000e+00> : vector<4x1xf32>
    %60 = tpu.matmul %57, %59, %cst_36 {dimension_numbers = #tpu.dot_dimension_numbers<[1], [0], [0], [1], [0, 0, 1, 1], [], []>} : vector<4x128xf32>, vector<128x1xf32>, vector<4x1xf32> -> vector<4x1xf32>
    %c0_37 = arith.constant 0 : index
    %c0_38 = arith.constant 0 : index
    %61 = vector.load %arg11[%c0_37, %c0_38] : memref<1x1xf32, #tpu.memory_space<vmem>>, vector<1x1xf32>
    %62 = vector.broadcast %61 : vector<1x1xf32> to vector<4x1xf32>
    %63 = arith.addf %60, %62 : vector<4x1xf32>
    %cst_39 = arith.constant 0.000000e+00 : f32
    %64 = vector.broadcast %cst_39 : f32 to vector<4x1xf32>
    %65 = arith.subf %64, %63 : vector<4x1xf32>
    %66 = math.exp %65 : vector<4x1xf32>
    %cst_40 = arith.constant 1.000000e+00 : f32
    %67 = vector.broadcast %cst_40 : f32 to vector<4x1xf32>
    %68 = arith.addf %67, %66 : vector<4x1xf32>
    %cst_41 = arith.constant 1.000000e+00 : f32
    %69 = vector.broadcast %cst_41 : f32 to vector<4x1xf32>
    %70 = arith.divf %69, %68 : vector<4x1xf32>
    %c0_42 = arith.constant 0 : index
    %c0_43 = arith.constant 0 : index
    %71 = vector.load %arg12[%c0_42, %c0_43] : memref<4x1xf32, #tpu.memory_space<vmem>>, vector<4x1xf32>
    tpu.vector_store %arg12[%c0_42, %c0_43], %70 {strides = array<i32>} : memref<4x1xf32, #tpu.memory_space<vmem>>, vector<4x1xf32>,
    return
  }
}

</mosaic_0001>

<llo_original>
// kernel: _lambda_.1
$region0: #{_lambda_.1}
  #allocation0 [shape = 'u32[]', space=smem, size = 0x4, offset = 0x4, fixed_abs, tag = 'smem constant byte address 0x4 - core index']
  #allocation1 [shape = 'u32[144,128]{1,0:T(1,128)}', space=vmem, size = 0x12000, scoped, tag = 'internal scratch']
  #allocation2 [shape = 'f32[1,1]{1,0:T(1,128)S(1)}', space=vmem, size = 0x200, scoped, tag = 'scoped memory for _lambda_.1']
  %s0 = inlined_call_operand.vmem [shape: bf16[256,16], index: 0, kind: input, shape index: {}]
  %s1 = inlined_call_operand.vmem [shape: bf16[256,256], index: 1, kind: input, shape index: {}]
  %s2 = inlined_call_operand.vmem [shape: f32[4,256], index: 2, kind: input, shape index: {}]
  %s3 = inlined_call_operand.vmem [shape: f32[256,4], index: 3, kind: input, shape index: {}]
  %s4 = inlined_call_operand.vmem [shape: bf16[16,64], index: 4, kind: input, shape index: {}]
  %s5 = inlined_call_operand.vmem [shape: f32[1,64], index: 5, kind: input, shape index: {}]
  %s6 = inlined_call_operand.vmem [shape: bf16[64,64], index: 6, kind: input, shape index: {}]
  %s7 = inlined_call_operand.vmem [shape: f32[1,64], index: 7, kind: input, shape index: {}]
  %s8 = inlined_call_operand.vmem [shape: bf16[64,64], index: 8, kind: input, shape index: {}]
  %s9 = inlined_call_operand.vmem [shape: f32[1,64], index: 9, kind: input, shape index: {}]
  %s10 = inlined_call_operand.vmem [shape: f32[128,1], index: 10, kind: input, shape index: {}]
  %s11 = inlined_call_operand.<no memory space> [shape: f32[1,1], index: 11, kind: input, shape index: {}]
  %s12 = inlined_call_operand.vmem [shape: f32[4,1], index: 12, kind: output, shape index: {0}]
  %s13 = inlined_call_operand.hbm [shape: f32[4,128], index: 13, kind: output, shape index: {1}]
  %14 = xla_tuple %s12, %s13
  %s15 = sld [smem:[#allocation0]]
  $region66: #{_lambda_.1} parent=0
    _
  %s17 = ssub.s32 1, %s15
  %s18 = scalar_select 0, %s17, %s15
  %v19 = vstv %s11
  %20 = vst [vmem:[#allocation2] sm:$0x1] %v19
  $region1: #{_lambda_.1} parent=0
    #allocation3 [shape = 'u8[2048]{0}', space=vmem, size = 0x800, scoped, tag = 'output window, operand 1, single buffered']
    #allocation4 [shape = 's32[1]{0}', space=sflag, size = 0x4, scoped, tag = 'scoped memory for _lambda_.1']
    %21 = vsyncpa [#allocation4], 0
    // Predicated region
    $region2: #{_lambda_.1} parent=1 // pred_check
      _
    $region3: #{_lambda_.1} parent=1 // pred_check_branch
      %23 = sbr.rel (0) target = $region5
    $region4: #{_lambda_.1} parent=1 // pred_region
      _
    $region5: #{_lambda_.1} parent=1 // pred_fallthru
      _
    // Predicated region
    $region6: #{_lambda_.1} parent=1 // pred_check
      _
    $region7: #{_lambda_.1} parent=1 // pred_check_branch
      %25 = sbr.rel (0) target = $region9
    $region8: #{_lambda_.1} parent=1 // pred_region
      _
    $region9: #{_lambda_.1} parent=1 // pred_fallthru
      _
    // Predicated region
    $region10: #{_lambda_.1} parent=1 // pred_check
      _
    $region11: #{_lambda_.1} parent=1 // pred_check_branch
      %27 = sbr.rel (0) target = $region13
    $region12: #{_lambda_.1} parent=1 // pred_region
      _
    $region13: #{_lambda_.1} parent=1 // pred_fallthru
      _
    // Predicated region
    $region14: #{_lambda_.1} parent=1 // pred_check
      _
    $region15: #{_lambda_.1} parent=1 // pred_check_branch
      %29 = sbr.rel (0) target = $region17
    $region16: #{_lambda_.1} parent=1 // pred_region
      _
    $region17: #{_lambda_.1} parent=1 // pred_fallthru
      _
    // Predicated region
    $region18: #{_lambda_.1} parent=1 // pred_check
      _
    $region19: #{_lambda_.1} parent=1 // pred_check_branch
      %31 = sbr.rel (0) target = $region21
    $region20: #{_lambda_.1} parent=1 // pred_region
      _
    $region21: #{_lambda_.1} parent=1 // pred_fallthru
      _
    // Predicated region
    $region22: #{_lambda_.1} parent=1 // pred_check
      _
    $region23: #{_lambda_.1} parent=1 // pred_check_branch
      %33 = sbr.rel (0) target = $region25
    $region24: #{_lambda_.1} parent=1 // pred_region
      _
    $region25: #{_lambda_.1} parent=1 // pred_fallthru
      _
    // Predicated region
    $region26: #{_lambda_.1} parent=1 // pred_check
      _
    $region27: #{_lambda_.1} parent=1 // pred_check_branch
      %35 = sbr.rel (0) target = $region29
    $region28: #{_lambda_.1} parent=1 // pred_region
      _
    $region29: #{_lambda_.1} parent=1 // pred_fallthru
      _
    // Predicated region
    $region30: #{_lambda_.1} parent=1 // pred_check
      _
    $region31: #{_lambda_.1} parent=1 // pred_check_branch
      %37 = sbr.rel (0) target = $region33
    $region32: #{_lambda_.1} parent=1 // pred_region
      _
    $region33: #{_lambda_.1} parent=1 // pred_fallthru
      _
    // Predicated region
    $region34: #{_lambda_.1} parent=1 // pred_check
      _
    $region35: #{_lambda_.1} parent=1 // pred_check_branch
      %39 = sbr.rel (0) target = $region37
    $region36: #{_lambda_.1} parent=1 // pred_region
      _
    $region37: #{_lambda_.1} parent=1 // pred_fallthru
      _
    // Predicated region
    $region38: #{_lambda_.1} parent=1 // pred_check
      _
    $region39: #{_lambda_.1} parent=1 // pred_check_branch
      %41 = sbr.rel (0) target = $region41
    $region40: #{_lambda_.1} parent=1 // pred_region
      _
    $region41: #{_lambda_.1} parent=1 // pred_fallthru
      _
    // Predicated region
    $region42: #{_lambda_.1} parent=1 // pred_check
      _
    $region43: #{_lambda_.1} parent=1 // pred_check_branch
      %43 = sbr.rel (0) target = $region45
    $region44: #{_lambda_.1} parent=1 // pred_region
      _
    $region45: #{_lambda_.1} parent=1 // pred_fallthru
      _
    // Predicated region
    $region46: #{_lambda_.1} parent=1 // pred_check
      _
    $region47: #{_lambda_.1} parent=1 // pred_check_branch
      %45 = sbr.rel (0) target = $region49
    $region48: #{_lambda_.1} parent=1 // pred_region
      _
    $region49: #{_lambda_.1} parent=1 // pred_fallthru
      _
    %v47 = vld [vmem:[%s1] sm:$0xff]
    %v48 = vld [vmem:[%s1 + $0x8] sm:$0xff]
    %v49 = vld [vmem:[%s1 + $0x10] sm:$0xff]
    %v50 = vld [vmem:[%s1 + $0x18] sm:$0xff]
    %v51 = vld [vmem:[%s1 + $0x20] sm:$0xff]
    %v52 = vld [vmem:[%s1 + $0x28] sm:$0xff]
    %v53 = vld [vmem:[%s1 + $0x30] sm:$0xff]
    %v54 = vld [vmem:[%s1 + $0x38] sm:$0xff]
    %v55 = vld [vmem:[%s1 + $0x40] sm:$0xff]
    %v56 = vld [vmem:[%s1 + $0x48] sm:$0xff]
    %v57 = vld [vmem:[%s1 + $0x50] sm:$0xff]
    %v58 = vld [vmem:[%s1 + $0x58] sm:$0xff]
    %v59 = vld [vmem:[%s1 + $0x60] sm:$0xff]
    %v60 = vld [vmem:[%s1 + $0x68] sm:$0xff]
    %v61 = vld [vmem:[%s1 + $0x70] sm:$0xff]
    %v62 = vld [vmem:[%s1 + $0x78] sm:$0xff]
    %v63 = vld [vmem:[%s1 + $0x80] sm:$0xff]
    %v64 = vld [vmem:[%s1 + $0x88] sm:$0xff]
    %v65 = vld [vmem:[%s1 + $0x90] sm:$0xff]
    %v66 = vld [vmem:[%s1 + $0x98] sm:$0xff]
    %v67 = vld [vmem:[%s1 + $0xa0] sm:$0xff]
    %v68 = vld [vmem:[%s1 + $0xa8] sm:$0xff]
    %v69 = vld [vmem:[%s1 + $0xb0] sm:$0xff]
    %v70 = vld [vmem:[%s1 + $0xb8] sm:$0xff]
    %v71 = vld [vmem:[%s1 + $0xc0] sm:$0xff]
    %v72 = vld [vmem:[%s1 + $0xc8] sm:$0xff]
    %v73 = vld [vmem:[%s1 + $0xd0] sm:$0xff]
    %v74 = vld [vmem:[%s1 + $0xd8] sm:$0xff]
    %v75 = vld [vmem:[%s1 + $0xe0] sm:$0xff]
    %v76 = vld [vmem:[%s1 + $0xe8] sm:$0xff]
    %v77 = vld [vmem:[%s1 + $0xf0] sm:$0xff]
    %v78 = vld [vmem:[%s1 + $0xf8] sm:$0xff]
    %v79 = vld [vmem:[%s0] sm:$0xf]
    %v80 = vld [vmem:[%s0 + $0x4] sm:$0xf]
    %v81 = vld [vmem:[%s0 + $0x8] sm:$0xf]
    %v82 = vld [vmem:[%s0 + $0xc] sm:$0xf]
    %v83 = vld [vmem:[%s0 + $0x10] sm:$0xf]
    %v84 = vld [vmem:[%s0 + $0x14] sm:$0xf]
    %v85 = vld [vmem:[%s0 + $0x18] sm:$0xf]
    %v86 = vld [vmem:[%s0 + $0x1c] sm:$0xf]
    %v87 = vld [vmem:[%s0 + $0x20] sm:$0xf]
    %v88 = vld [vmem:[%s0 + $0x24] sm:$0xf]
    %v89 = vld [vmem:[%s0 + $0x28] sm:$0xf]
    %v90 = vld [vmem:[%s0 + $0x2c] sm:$0xf]
    %v91 = vld [vmem:[%s0 + $0x30] sm:$0xf]
    %v92 = vld [vmem:[%s0 + $0x34] sm:$0xf]
    %v93 = vld [vmem:[%s0 + $0x38] sm:$0xf]
    %v94 = vld [vmem:[%s0 + $0x3c] sm:$0xf]
    %v95 = vld [vmem:[%s0 + $0x40] sm:$0xf]
    %v96 = vld [vmem:[%s0 + $0x44] sm:$0xf]
    %v97 = vld [vmem:[%s0 + $0x48] sm:$0xf]
    %v98 = vld [vmem:[%s0 + $0x4c] sm:$0xf]
    %v99 = vld [vmem:[%s0 + $0x50] sm:$0xf]
    %v100 = vld [vmem:[%s0 + $0x54] sm:$0xf]
    %v101 = vld [vmem:[%s0 + $0x58] sm:$0xf]
    %v102 = vld [vmem:[%s0 + $0x5c] sm:$0xf]
    %v103 = vld [vmem:[%s0 + $0x60] sm:$0xf]
    %v104 = vld [vmem:[%s0 + $0x64] sm:$0xf]
    %v105 = vld [vmem:[%s0 + $0x68] sm:$0xf]
    %v106 = vld [vmem:[%s0 + $0x6c] sm:$0xf]
    %v107 = vld [vmem:[%s0 + $0x70] sm:$0xf]
    %v108 = vld [vmem:[%s0 + $0x74] sm:$0xf]
    %v109 = vld [vmem:[%s0 + $0x78] sm:$0xf]
    %v110 = vld [vmem:[%s0 + $0x7c] sm:$0xf]
    %v111 = vld [vmem:[%s4] sm:$0xf]
    %v112 = vld [vmem:[%s4 + $0x4] sm:$0xf]
    %v145 = vunpack.c.l.b16 %v79
    %v146 = vunpack.c.l.b16 %v80
    %v147 = vunpack.c.l.b16 %v81
    %v148 = vunpack.c.l.b16 %v82
    %v149 = vunpack.c.l.b16 %v83
    %v150 = vunpack.c.l.b16 %v84
    %v151 = vunpack.c.l.b16 %v85
    %v152 = vunpack.c.l.b16 %v86
    %v153 = vunpack.c.l.b16 %v87
    %v154 = vunpack.c.l.b16 %v88
    %v155 = vunpack.c.l.b16 %v89
    %v156 = vunpack.c.l.b16 %v90
    %v157 = vunpack.c.l.b16 %v91
    %v158 = vunpack.c.l.b16 %v92
    %v159 = vunpack.c.l.b16 %v93
    %v160 = vunpack.c.l.b16 %v94
    %v161 = vunpack.c.l.b16 %v95
    %v162 = vunpack.c.l.b16 %v96
    %v163 = vunpack.c.l.b16 %v97
    %v164 = vunpack.c.l.b16 %v98
    %v165 = vunpack.c.l.b16 %v99
    %v166 = vunpack.c.l.b16 %v100
    %v167 = vunpack.c.l.b16 %v101
    %v168 = vunpack.c.l.b16 %v102
    %v169 = vunpack.c.l.b16 %v103
    %v170 = vunpack.c.l.b16 %v104
    %v171 = vunpack.c.l.b16 %v105
    %v172 = vunpack.c.l.b16 %v106
    %v173 = vunpack.c.l.b16 %v107
    %v174 = vunpack.c.l.b16 %v108
    %v175 = vunpack.c.l.b16 %v109
    %v176 = vunpack.c.l.b16 %v110
    %v177 = vpack.c.b16 %v146, %v145
    %v178 = vpack.c.b16 %v148, %v147
    %v179 = vpack.c.b16 %v150, %v149
    %v180 = vpack.c.b16 %v152, %v151
    %v181 = vpack.c.b16 %v154, %v153
    %v182 = vpack.c.b16 %v156, %v155
    %v183 = vpack.c.b16 %v158, %v157
    %v184 = vpack.c.b16 %v160, %v159
    %v185 = vpack.c.b16 %v162, %v161
    %v186 = vpack.c.b16 %v164, %v163
    %v187 = vpack.c.b16 %v166, %v165
    %v188 = vpack.c.b16 %v168, %v167
    %v189 = vpack.c.b16 %v170, %v169
    %v190 = vpack.c.b16 %v172, %v171
    %v191 = vpack.c.b16 %v174, %v173
    %v192 = vpack.c.b16 %v176, %v175
    %v195 = vunpack.c.l.b16 %v111
    %v196 = vunpack.c.l.b16 %v112
    %v197 = vpack.c.b16 %v196, %v195
    %vm199 = vcmask 130048
    %v201 = vsel %vm199, %v177, 0
    %v204 = vsel %vm199, %v178, 0
    %v207 = vsel %vm199, %v179, 0
    %v210 = vsel %vm199, %v180, 0
    %v213 = vsel %vm199, %v181, 0
    %v216 = vsel %vm199, %v182, 0
    %v219 = vsel %vm199, %v183, 0
    %v222 = vsel %vm199, %v184, 0
    %v225 = vsel %vm199, %v185, 0
    %v228 = vsel %vm199, %v186, 0
    %v231 = vsel %vm199, %v187, 0
    %v234 = vsel %vm199, %v188, 0
    %v237 = vsel %vm199, %v189, 0
    %v240 = vsel %vm199, %v190, 0
    %v243 = vsel %vm199, %v191, 0
    %v246 = vsel %vm199, %v192, 0
    %248 = vmatprep.subr.bf16.mxu0 0
    %249 = vmatpush1.bf16.msra.mxu0 0
    %250 = vmatprep.subr.bf16.mxu0 0
    %251 = vmatpush1.bf16.msra.mxu0 0
    %252 = vmatprep.subr.bf16.mxu0 0
    %253 = vmatpush1.bf16.msra.mxu0 0
    %254 = vmatprep.subr.bf16.mxu0 0
    %255 = vmatpush1.bf16.msra.mxu0 0
    %256 = vmatprep.subr.bf16.mxu0 0
    %257 = vmatpush1.bf16.msra.mxu0 0
    %258 = vmatprep.subr.bf16.mxu0 0
    %259 = vmatpush1.bf16.msra.mxu0 0
    %260 = vmatprep.subr.bf16.mxu0 0
    %261 = vmatpush1.bf16.msra.mxu0 0
    %262 = vmatprep.subr.bf16.mxu0 0
    %263 = vmatpush1.bf16.msra.mxu0 %v197
    %264 = vmatprep.subr.bf16.mxu0 0
    %265 = vmatpush2.bf16.msra.mxu0 0
    %266 = vmatprep.subr.bf16.mxu0 0
    %267 = vmatpush2.bf16.msra.mxu0 0
    %268 = vmatprep.subr.bf16.mxu0 0
    %269 = vmatpush2.bf16.msra.mxu0 0
    %270 = vmatprep.subr.bf16.mxu0 0
    %271 = vmatpush2.bf16.msra.mxu0 0
    %272 = vmatprep.subr.bf16.mxu0 0
    %273 = vmatpush2.bf16.msra.mxu0 0
    %274 = vmatprep.subr.bf16.mxu0 0
    %275 = vmatpush2.bf16.msra.mxu0 0
    %276 = vmatprep.subr.bf16.mxu0 0
    %277 = vmatpush2.bf16.msra.mxu0 0
    %278 = vmatprep.subr.bf16.mxu0 0
    %279 = vmatpush2.bf16.msra.mxu0 0
    %280 = vmatprep.mubr.bf16.mxu0 0
    %281 = vmatmul.mubr.bf16.gmra.mxu0 %v201
    %v282 = vpop.f32.mrf.mxu0
    %v283 = vadd.f32 0.0, %v282
    %v284 = vpop.f32.mrf.mxu0
    %v285 = vpop.f32.mrf.mxu0
    %v286 = vadd.f32 0.0, %v285
    %v287 = vpop.f32.mrf.mxu0
    %288 = vmatprep.mubr.bf16.mxu0 0
    %289 = vmatmul.mubr.bf16.gmra.mxu0 %v204
    %v290 = vpop.f32.mrf.mxu0
    %v291 = vadd.f32 0.0, %v290
    %v292 = vpop.f32.mrf.mxu0
    %v293 = vpop.f32.mrf.mxu0
    %v294 = vadd.f32 0.0, %v293
    %v295 = vpop.f32.mrf.mxu0
    %296 = vmatprep.mubr.bf16.mxu0 0
    %297 = vmatmul.mubr.bf16.gmra.mxu0 %v207
    %v298 = vpop.f32.mrf.mxu0
    %v299 = vadd.f32 0.0, %v298
    %v300 = vpop.f32.mrf.mxu0
    %v301 = vpop.f32.mrf.mxu0
    %v302 = vadd.f32 0.0, %v301
    %v303 = vpop.f32.mrf.mxu0
    %304 = vmatprep.mubr.bf16.mxu0 0
    %305 = vmatmul.mubr.bf16.gmra.mxu0 %v210
    %v306 = vpop.f32.mrf.mxu0
    %v307 = vadd.f32 0.0, %v306
    %v308 = vpop.f32.mrf.mxu0
    %v309 = vpop.f32.mrf.mxu0
    %v310 = vadd.f32 0.0, %v309
    %v311 = vpop.f32.mrf.mxu0
    %312 = vmatprep.mubr.bf16.mxu0 0
    %313 = vmatmul.mubr.bf16.gmra.mxu0 %v213
    %v314 = vpop.f32.mrf.mxu0
    %v315 = vadd.f32 0.0, %v314
    %v316 = vpop.f32.mrf.mxu0
    %v317 = vpop.f32.mrf.mxu0
    %v318 = vadd.f32 0.0, %v317
    %v319 = vpop.f32.mrf.mxu0
    %320 = vmatprep.mubr.bf16.mxu0 0
    %321 = vmatmul.mubr.bf16.gmra.mxu0 %v216
    %v322 = vpop.f32.mrf.mxu0
    %v323 = vadd.f32 0.0, %v322
    %v324 = vpop.f32.mrf.mxu0
    %v325 = vpop.f32.mrf.mxu0
    %v326 = vadd.f32 0.0, %v325
    %v327 = vpop.f32.mrf.mxu0
    %328 = vmatprep.mubr.bf16.mxu0 0
    %329 = vmatmul.mubr.bf16.gmra.mxu0 %v219
    %v330 = vpop.f32.mrf.mxu0
    %v331 = vadd.f32 0.0, %v330
    %v332 = vpop.f32.mrf.mxu0
    %v333 = vpop.f32.mrf.mxu0
    %v334 = vadd.f32 0.0, %v333
    %v335 = vpop.f32.mrf.mxu0
    %336 = vmatprep.mubr.bf16.mxu0 0
    %337 = vmatmul.mubr.bf16.gmra.mxu0 %v222
    %v338 = vpop.f32.mrf.mxu0
    %v339 = vadd.f32 0.0, %v338
    %v340 = vpop.f32.mrf.mxu0
    %v341 = vpop.f32.mrf.mxu0
    %v342 = vadd.f32 0.0, %v341
    %v343 = vpop.f32.mrf.mxu0
    %344 = vmatprep.mubr.bf16.mxu0 0
    %345 = vmatmul.mubr.bf16.gmra.mxu0 %v225
    %v346 = vpop.f32.mrf.mxu0
    %v347 = vadd.f32 0.0, %v346
    %v348 = vpop.f32.mrf.mxu0
    %v349 = vpop.f32.mrf.mxu0
    %v350 = vadd.f32 0.0, %v349
    %v351 = vpop.f32.mrf.mxu0
    %352 = vmatprep.mubr.bf16.mxu0 0
    %353 = vmatmul.mubr.bf16.gmra.mxu0 %v228
    %v354 = vpop.f32.mrf.mxu0
    %v355 = vadd.f32 0.0, %v354
    %v356 = vpop.f32.mrf.mxu0
    %v357 = vpop.f32.mrf.mxu0
    %v358 = vadd.f32 0.0, %v357
    %v359 = vpop.f32.mrf.mxu0
    %360 = vmatprep.mubr.bf16.mxu0 0
    %361 = vmatmul.mubr.bf16.gmra.mxu0 %v231
    %v362 = vpop.f32.mrf.mxu0
    %v363 = vadd.f32 0.0, %v362
    %v364 = vpop.f32.mrf.mxu0
    %v365 = vpop.f32.mrf.mxu0
    %v366 = vadd.f32 0.0, %v365
    %v367 = vpop.f32.mrf.mxu0
    %368 = vmatprep.mubr.bf16.mxu0 0
    %369 = vmatmul.mubr.bf16.gmra.mxu0 %v234
    %v370 = vpop.f32.mrf.mxu0
    %v371 = vadd.f32 0.0, %v370
    %v372 = vpop.f32.mrf.mxu0
    %v373 = vpop.f32.mrf.mxu0
    %v374 = vadd.f32 0.0, %v373
    %v375 = vpop.f32.mrf.mxu0
    %376 = vmatprep.mubr.bf16.mxu0 0
    %377 = vmatmul.mubr.bf16.gmra.mxu0 %v237
    %v378 = vpop.f32.mrf.mxu0
    %v379 = vadd.f32 0.0, %v378
    %v380 = vpop.f32.mrf.mxu0
    %v381 = vpop.f32.mrf.mxu0
    %v382 = vadd.f32 0.0, %v381
    %v383 = vpop.f32.mrf.mxu0
    %384 = vmatprep.mubr.bf16.mxu0 0
    %385 = vmatmul.mubr.bf16.gmra.mxu0 %v240
    %v386 = vpop.f32.mrf.mxu0
    %v387 = vadd.f32 0.0, %v386
    %v388 = vpop.f32.mrf.mxu0
    %v389 = vpop.f32.mrf.mxu0
    %v390 = vadd.f32 0.0, %v389
    %v391 = vpop.f32.mrf.mxu0
    %392 = vmatprep.mubr.bf16.mxu0 0
    %393 = vmatmul.mubr.bf16.gmra.mxu0 %v243
    %v394 = vpop.f32.mrf.mxu0
    %v395 = vadd.f32 0.0, %v394
    %v396 = vpop.f32.mrf.mxu0
    %v397 = vpop.f32.mrf.mxu0
    %v398 = vadd.f32 0.0, %v397
    %v399 = vpop.f32.mrf.mxu0
    %400 = vmatprep.mubr.bf16.mxu0 0
    %401 = vmatmul.mubr.bf16.gmra.mxu0 %v246
    %v402 = vpop.f32.mrf.mxu0
    %v403 = vadd.f32 0.0, %v402
    %v404 = vpop.f32.mrf.mxu0
    %v405 = vpop.f32.mrf.mxu0
    %v406 = vadd.f32 0.0, %v405
    %v407 = vpop.f32.mrf.mxu0
    %408 = vdwg.mxu0
    %v409 = vpack.c.bf16 %v286, %v283
    %v410 = vpack.c.bf16 %v294, %v291
    %v411 = vpack.c.bf16 %v302, %v299
    %v412 = vpack.c.bf16 %v310, %v307
    %v413 = vpack.c.bf16 %v318, %v315
    %v414 = vpack.c.bf16 %v326, %v323
    %v415 = vpack.c.bf16 %v334, %v331
    %v416 = vpack.c.bf16 %v342, %v339
    %v417 = vpack.c.bf16 %v350, %v347
    %v418 = vpack.c.bf16 %v358, %v355
    %v419 = vpack.c.bf16 %v366, %v363
    %v420 = vpack.c.bf16 %v374, %v371
    %v421 = vpack.c.bf16 %v382, %v379
    %v422 = vpack.c.bf16 %v390, %v387
    %v423 = vpack.c.bf16 %v398, %v395
    %v424 = vpack.c.bf16 %v406, %v403
    %v425 = vld [vmem:[%s5] sm:$0x1]
    %v427 = vlaneseq
    %v428 = vshrl.u32 %v427, 7
    %v429 = vsub.s32 0, %v428
    %v430 = vrot.slane %v425, %v429
    %v464 = vunpack.c.l.b16 %v47
    %v465 = vunpack.c.h.b16 %v47
    %v466 = vunpack.c.l.b16 %v48
    %v467 = vunpack.c.h.b16 %v48
    %v468 = vunpack.c.l.b16 %v49
    %v469 = vunpack.c.h.b16 %v49
    %v470 = vunpack.c.l.b16 %v50
    %v471 = vunpack.c.h.b16 %v50
    %v472 = vunpack.c.l.b16 %v51
    %v473 = vunpack.c.h.b16 %v51
    %v474 = vunpack.c.l.b16 %v52
    %v475 = vunpack.c.h.b16 %v52
    %v476 = vunpack.c.l.b16 %v53
    %v477 = vunpack.c.h.b16 %v53
    %v478 = vunpack.c.l.b16 %v54
    %v479 = vunpack.c.h.b16 %v54
    %v480 = vunpack.c.l.b16 %v55
    %v481 = vunpack.c.h.b16 %v55
    %v482 = vunpack.c.l.b16 %v56
    %v483 = vunpack.c.h.b16 %v56
    %v484 = vunpack.c.l.b16 %v57
    %v485 = vunpack.c.h.b16 %v57
    %v486 = vunpack.c.l.b16 %v58
    %v487 = vunpack.c.h.b16 %v58
    %v488 = vunpack.c.l.b16 %v59
    %v489 = vunpack.c.h.b16 %v59
    %v490 = vunpack.c.l.b16 %v60
    %v491 = vunpack.c.h.b16 %v60
    %v492 = vunpack.c.l.b16 %v61
    %v493 = vunpack.c.h.b16 %v61
    %v494 = vunpack.c.l.b16 %v62
    %v495 = vunpack.c.h.b16 %v62
    %v496 = vunpack.c.l.b16 %v63
    %v497 = vunpack.c.h.b16 %v63
    %v498 = vunpack.c.l.b16 %v64
    %v499 = vunpack.c.h.b16 %v64
    %v500 = vunpack.c.l.b16 %v65
    %v501 = vunpack.c.h.b16 %v65
    %v502 = vunpack.c.l.b16 %v66
    %v503 = vunpack.c.h.b16 %v66
    %v504 = vunpack.c.l.b16 %v67
    %v505 = vunpack.c.h.b16 %v67
    %v506 = vunpack.c.l.b16 %v68
    %v507 = vunpack.c.h.b16 %v68
    %v508 = vunpack.c.l.b16 %v69
    %v509 = vunpack.c.h.b16 %v69
    %v510 = vunpack.c.l.b16 %v70
    %v511 = vunpack.c.h.b16 %v70
    %v512 = vunpack.c.l.b16 %v71
    %v513 = vunpack.c.h.b16 %v71
    %v514 = vunpack.c.l.b16 %v72
    %v515 = vunpack.c.h.b16 %v72
    %v516 = vunpack.c.l.b16 %v73
    %v517 = vunpack.c.h.b16 %v73
    %v518 = vunpack.c.l.b16 %v74
    %v519 = vunpack.c.h.b16 %v74
    %v520 = vunpack.c.l.b16 %v75
    %v521 = vunpack.c.h.b16 %v75
    %v522 = vunpack.c.l.b16 %v76
    %v523 = vunpack.c.h.b16 %v76
    %v524 = vunpack.c.l.b16 %v77
    %v525 = vunpack.c.h.b16 %v77
    %v526 = vunpack.c.l.b16 %v78
    %v527 = vunpack.c.h.b16 %v78
    %v528 = vpack.c.b16 %v466, %v464
    %v529 = vpack.c.b16 %v467, %v465
    %v530 = vpack.c.b16 %v470, %v468
    %v531 = vpack.c.b16 %v471, %v469
    %v532 = vpack.c.b16 %v474, %v472
    %v533 = vpack.c.b16 %v475, %v473
    %v534 = vpack.c.b16 %v478, %v476
    %v535 = vpack.c.b16 %v479, %v477
    %v536 = vpack.c.b16 %v482, %v480
    %v537 = vpack.c.b16 %v483, %v481
    %v538 = vpack.c.b16 %v486, %v484
    %v539 = vpack.c.b16 %v487, %v485
    %v540 = vpack.c.b16 %v490, %v488
    %v541 = vpack.c.b16 %v491, %v489
    %v542 = vpack.c.b16 %v494, %v492
    %v543 = vpack.c.b16 %v495, %v493
    %v544 = vpack.c.b16 %v498, %v496
    %v545 = vpack.c.b16 %v499, %v497
    %v546 = vpack.c.b16 %v502, %v500
    %v547 = vpack.c.b16 %v503, %v501
    %v548 = vpack.c.b16 %v506, %v504
    %v549 = vpack.c.b16 %v507, %v505
    %v550 = vpack.c.b16 %v510, %v508
    %v551 = vpack.c.b16 %v511, %v509
    %v552 = vpack.c.b16 %v514, %v512
    %v553 = vpack.c.b16 %v515, %v513
    %v554 = vpack.c.b16 %v518, %v516
    %v555 = vpack.c.b16 %v519, %v517
    %v556 = vpack.c.b16 %v522, %v520
    %v557 = vpack.c.b16 %v523, %v521
    %v558 = vpack.c.b16 %v526, %v524
    %v559 = vpack.c.b16 %v527, %v525
    %592 = vmatprep.subr.bf16.mxu0 0
    %593 = vmatpush1.bf16.msra.mxu0 %v416
    %594 = vmatprep.subr.bf16.mxu0 0
    %595 = vmatpush1.bf16.msra.mxu0 %v415
    %596 = vmatprep.subr.bf16.mxu0 0
    %597 = vmatpush1.bf16.msra.mxu0 %v414
    %598 = vmatprep.subr.bf16.mxu0 0
    %599 = vmatpush1.bf16.msra.mxu0 %v413
    %600 = vmatprep.subr.bf16.mxu0 0
    %601 = vmatpush1.bf16.msra.mxu0 %v412
    %602 = vmatprep.subr.bf16.mxu0 0
    %603 = vmatpush1.bf16.msra.mxu0 %v411
    %604 = vmatprep.subr.bf16.mxu0 0
    %605 = vmatpush1.bf16.msra.mxu0 %v410
    %606 = vmatprep.subr.bf16.mxu0 0
    %607 = vmatpush1.bf16.msra.mxu0 %v409
    %608 = vmatprep.subr.bf16.mxu0 0
    %609 = vmatpush2.bf16.msra.mxu0 %v424
    %610 = vmatprep.subr.bf16.mxu0 0
    %611 = vmatpush2.bf16.msra.mxu0 %v423
    %612 = vmatprep.subr.bf16.mxu0 0
    %613 = vmatpush2.bf16.msra.mxu0 %v422
    %614 = vmatprep.subr.bf16.mxu0 0
    %615 = vmatpush2.bf16.msra.mxu0 %v421
    %616 = vmatprep.subr.bf16.mxu0 0
    %617 = vmatpush2.bf16.msra.mxu0 %v420
    %618 = vmatprep.subr.bf16.mxu0 0
    %619 = vmatpush2.bf16.msra.mxu0 %v419
    %620 = vmatprep.subr.bf16.mxu0 0
    %621 = vmatpush2.bf16.msra.mxu0 %v418
    %622 = vmatprep.subr.bf16.mxu0 0
    %623 = vmatpush2.bf16.msra.mxu0 %v417
    %624 = vmatprep.mubr.bf16.mxu0 %v529
    %625 = vmatmul.mubr.bf16.gmra.mxu0 %v528
    %v626 = vpop.f32.mrf.mxu0
    %v627 = vadd.f32 %v430, %v626
    %v628 = vpop.f32.mrf.mxu0
    %v629 = vpop.f32.mrf.mxu0
    %v630 = vadd.f32 %v430, %v629
    %v631 = vpop.f32.mrf.mxu0
    %632 = vmatprep.mubr.bf16.mxu0 %v531
    %633 = vmatmul.mubr.bf16.gmra.mxu0 %v530
    %v634 = vpop.f32.mrf.mxu0
    %v635 = vadd.f32 %v430, %v634
    %v636 = vpop.f32.mrf.mxu0
    %v637 = vpop.f32.mrf.mxu0
    %v638 = vadd.f32 %v430, %v637
    %v639 = vpop.f32.mrf.mxu0
    %640 = vmatprep.mubr.bf16.mxu0 %v533
    %641 = vmatmul.mubr.bf16.gmra.mxu0 %v532
    %v642 = vpop.f32.mrf.mxu0
    %v643 = vadd.f32 %v430, %v642
    %v644 = vpop.f32.mrf.mxu0
    %v645 = vpop.f32.mrf.mxu0
    %v646 = vadd.f32 %v430, %v645
    %v647 = vpop.f32.mrf.mxu0
    %648 = vmatprep.mubr.bf16.mxu0 %v535
    %649 = vmatmul.mubr.bf16.gmra.mxu0 %v534
    %v650 = vpop.f32.mrf.mxu0
    %v651 = vadd.f32 %v430, %v650
    %v652 = vpop.f32.mrf.mxu0
    %v653 = vpop.f32.mrf.mxu0
    %v654 = vadd.f32 %v430, %v653
    %v655 = vpop.f32.mrf.mxu0
    %656 = vmatprep.mubr.bf16.mxu0 %v537
    %657 = vmatmul.mubr.bf16.gmra.mxu0 %v536
    %v658 = vpop.f32.mrf.mxu0
    %v659 = vadd.f32 %v430, %v658
    %v660 = vpop.f32.mrf.mxu0
    %v661 = vpop.f32.mrf.mxu0
    %v662 = vadd.f32 %v430, %v661
    %v663 = vpop.f32.mrf.mxu0
    %664 = vmatprep.mubr.bf16.mxu0 %v539
    %665 = vmatmul.mubr.bf16.gmra.mxu0 %v538
    %v666 = vpop.f32.mrf.mxu0
    %v667 = vadd.f32 %v430, %v666
    %v668 = vpop.f32.mrf.mxu0
    %v669 = vpop.f32.mrf.mxu0
    %v670 = vadd.f32 %v430, %v669
    %v671 = vpop.f32.mrf.mxu0
    %672 = vmatprep.mubr.bf16.mxu0 %v541
    %673 = vmatmul.mubr.bf16.gmra.mxu0 %v540
    %v674 = vpop.f32.mrf.mxu0
    %v675 = vadd.f32 %v430, %v674
    %v676 = vpop.f32.mrf.mxu0
    %v677 = vpop.f32.mrf.mxu0
    %v678 = vadd.f32 %v430, %v677
    %v679 = vpop.f32.mrf.mxu0
    %680 = vmatprep.mubr.bf16.mxu0 %v543
    %681 = vmatmul.mubr.bf16.gmra.mxu0 %v542
    %v682 = vpop.f32.mrf.mxu0
    %v683 = vadd.f32 %v430, %v682
    %v684 = vpop.f32.mrf.mxu0
    %v685 = vpop.f32.mrf.mxu0
    %v686 = vadd.f32 %v430, %v685
    %v687 = vpop.f32.mrf.mxu0
    %688 = vmatprep.mubr.bf16.mxu0 %v545
    %689 = vmatmul.mubr.bf16.gmra.mxu0 %v544
    %v690 = vpop.f32.mrf.mxu0
    %v691 = vadd.f32 %v430, %v690
    %v692 = vpop.f32.mrf.mxu0
    %v693 = vpop.f32.mrf.mxu0
    %v694 = vadd.f32 %v430, %v693
    %v695 = vpop.f32.mrf.mxu0
    %696 = vmatprep.mubr.bf16.mxu0 %v547
    %697 = vmatmul.mubr.bf16.gmra.mxu0 %v546
    %v698 = vpop.f32.mrf.mxu0
    %v699 = vadd.f32 %v430, %v698
    %v700 = vpop.f32.mrf.mxu0
    %v701 = vpop.f32.mrf.mxu0
    %v702 = vadd.f32 %v430, %v701
    %v703 = vpop.f32.mrf.mxu0
    %704 = vmatprep.mubr.bf16.mxu0 %v549
    %705 = vmatmul.mubr.bf16.gmra.mxu0 %v548
    %v706 = vpop.f32.mrf.mxu0
    %v707 = vadd.f32 %v430, %v706
    %v708 = vpop.f32.mrf.mxu0
    %v709 = vpop.f32.mrf.mxu0
    %v710 = vadd.f32 %v430, %v709
    %v711 = vpop.f32.mrf.mxu0
    %712 = vmatprep.mubr.bf16.mxu0 %v551
    %713 = vmatmul.mubr.bf16.gmra.mxu0 %v550
    %v714 = vpop.f32.mrf.mxu0
    %v715 = vadd.f32 %v430, %v714
    %v716 = vpop.f32.mrf.mxu0
    %v717 = vpop.f32.mrf.mxu0
    %v718 = vadd.f32 %v430, %v717
    %v719 = vpop.f32.mrf.mxu0
    %720 = vmatprep.mubr.bf16.mxu0 %v553
    %721 = vmatmul.mubr.bf16.gmra.mxu0 %v552
    %v722 = vpop.f32.mrf.mxu0
    %v723 = vadd.f32 %v430, %v722
    %v724 = vpop.f32.mrf.mxu0
    %v725 = vpop.f32.mrf.mxu0
    %v726 = vadd.f32 %v430, %v725
    %v727 = vpop.f32.mrf.mxu0
    %728 = vmatprep.mubr.bf16.mxu0 %v555
    %729 = vmatmul.mubr.bf16.gmra.mxu0 %v554
    %v730 = vpop.f32.mrf.mxu0
    %v731 = vadd.f32 %v430, %v730
    %v732 = vpop.f32.mrf.mxu0
    %v733 = vpop.f32.mrf.mxu0
    %v734 = vadd.f32 %v430, %v733
    %v735 = vpop.f32.mrf.mxu0
    %736 = vmatprep.mubr.bf16.mxu0 %v557
    %737 = vmatmul.mubr.bf16.gmra.mxu0 %v556
    %v738 = vpop.f32.mrf.mxu0
    %v739 = vadd.f32 %v430, %v738
    %v740 = vpop.f32.mrf.mxu0
    %v741 = vpop.f32.mrf.mxu0
    %v742 = vadd.f32 %v430, %v741
    %v743 = vpop.f32.mrf.mxu0
    %744 = vmatprep.mubr.bf16.mxu0 %v559
    %745 = vmatmul.mubr.bf16.gmra.mxu0 %v558
    %v746 = vpop.f32.mrf.mxu0
    %v747 = vadd.f32 %v430, %v746
    %v748 = vpop.f32.mrf.mxu0
    %v749 = vpop.f32.mrf.mxu0
    %v750 = vadd.f32 %v430, %v749
    %v751 = vpop.f32.mrf.mxu0
    %752 = vdwg.mxu0
    %v753 = vmax.f32 %v627, 0.0
    %v754 = vmax.f32 %v630, 0.0
    %v755 = vmax.f32 %v635, 0.0
    %v756 = vmax.f32 %v638, 0.0
    %v757 = vmax.f32 %v643, 0.0
    %v758 = vmax.f32 %v646, 0.0
    %v759 = vmax.f32 %v651, 0.0
    %v760 = vmax.f32 %v654, 0.0
    %v761 = vmax.f32 %v659, 0.0
    %v762 = vmax.f32 %v662, 0.0
    %v763 = vmax.f32 %v667, 0.0
    %v764 = vmax.f32 %v670, 0.0
    %v765 = vmax.f32 %v675, 0.0
    %v766 = vmax.f32 %v678, 0.0
    %v767 = vmax.f32 %v683, 0.0
    %v768 = vmax.f32 %v686, 0.0
    %v769 = vmax.f32 %v691, 0.0
    %v770 = vmax.f32 %v694, 0.0
    %v771 = vmax.f32 %v699, 0.0
    %v772 = vmax.f32 %v702, 0.0
    %v773 = vmax.f32 %v707, 0.0
    %v774 = vmax.f32 %v710, 0.0
    %v775 = vmax.f32 %v715, 0.0
    %v776 = vmax.f32 %v718, 0.0
    %v777 = vmax.f32 %v723, 0.0
    %v778 = vmax.f32 %v726, 0.0
    %v779 = vmax.f32 %v731, 0.0
    %v780 = vmax.f32 %v734, 0.0
    %v781 = vmax.f32 %v739, 0.0
    %v782 = vmax.f32 %v742, 0.0
    %v783 = vmax.f32 %v747, 0.0
    %v784 = vmax.f32 %v750, 0.0
    %v785 = vpack.c.bf16 %v754, %v753
    %v786 = vpack.c.bf16 %v756, %v755
    %v787 = vpack.c.bf16 %v758, %v757
    %v788 = vpack.c.bf16 %v760, %v759
    %v789 = vpack.c.bf16 %v762, %v761
    %v790 = vpack.c.bf16 %v764, %v763
    %v791 = vpack.c.bf16 %v766, %v765
    %v792 = vpack.c.bf16 %v768, %v767
    %v793 = vpack.c.bf16 %v770, %v769
    %v794 = vpack.c.bf16 %v772, %v771
    %v795 = vpack.c.bf16 %v774, %v773
    %v796 = vpack.c.bf16 %v776, %v775
    %v797 = vpack.c.bf16 %v778, %v777
    %v798 = vpack.c.bf16 %v780, %v779
    %v799 = vpack.c.bf16 %v782, %v781
    %v800 = vpack.c.bf16 %v784, %v783
    %v801 = vld [vmem:[%s6] sm:$0xf]
    %v802 = vld [vmem:[%s6 + $0x4] sm:$0xf]
    %v803 = vld [vmem:[%s6 + $0x8] sm:$0xf]
    %v804 = vld [vmem:[%s6 + $0xc] sm:$0xf]
    %v805 = vld [vmem:[%s6 + $0x10] sm:$0xf]
    %v806 = vld [vmem:[%s6 + $0x14] sm:$0xf]
    %v807 = vld [vmem:[%s6 + $0x18] sm:$0xf]
    %v808 = vld [vmem:[%s6 + $0x1c] sm:$0xf]
    %v817 = vunpack.c.l.b16 %v801
    %v818 = vunpack.c.l.b16 %v802
    %v819 = vunpack.c.l.b16 %v803
    %v820 = vunpack.c.l.b16 %v804
    %v821 = vunpack.c.l.b16 %v805
    %v822 = vunpack.c.l.b16 %v806
    %v823 = vunpack.c.l.b16 %v807
    %v824 = vunpack.c.l.b16 %v808
    %v825 = vpack.c.b16 %v818, %v817
    %v826 = vpack.c.b16 %v820, %v819
    %v827 = vpack.c.b16 %v822, %v821
    %v828 = vpack.c.b16 %v824, %v823
    %vm833 = vcmask 523264
    %v835 = vsel %vm833, %v785, 0
    %v838 = vsel %vm833, %v786, 0
    %v841 = vsel %vm833, %v787, 0
    %v844 = vsel %vm833, %v788, 0
    %v847 = vsel %vm833, %v789, 0
    %v850 = vsel %vm833, %v790, 0
    %v853 = vsel %vm833, %v791, 0
    %v856 = vsel %vm833, %v792, 0
    %v859 = vsel %vm833, %v793, 0
    %v862 = vsel %vm833, %v794, 0
    %v865 = vsel %vm833, %v795, 0
    %v868 = vsel %vm833, %v796, 0
    %v871 = vsel %vm833, %v797, 0
    %v874 = vsel %vm833, %v798, 0
    %v877 = vsel %vm833, %v799, 0
    %v880 = vsel %vm833, %v800, 0
    %882 = vmatprep.subr.bf16.mxu0 0
    %883 = vmatpush1.bf16.msra.mxu0 0
    %884 = vmatprep.subr.bf16.mxu0 0
    %885 = vmatpush1.bf16.msra.mxu0 0
    %886 = vmatprep.subr.bf16.mxu0 0
    %887 = vmatpush1.bf16.msra.mxu0 0
    %888 = vmatprep.subr.bf16.mxu0 0
    %889 = vmatpush1.bf16.msra.mxu0 0
    %890 = vmatprep.subr.bf16.mxu0 0
    %891 = vmatpush1.bf16.msra.mxu0 %v828
    %892 = vmatprep.subr.bf16.mxu0 0
    %893 = vmatpush1.bf16.msra.mxu0 %v827
    %894 = vmatprep.subr.bf16.mxu0 0
    %895 = vmatpush1.bf16.msra.mxu0 %v826
    %896 = vmatprep.subr.bf16.mxu0 0
    %897 = vmatpush1.bf16.msra.mxu0 %v825
    %898 = vmatprep.subr.bf16.mxu0 0
    %899 = vmatpush2.bf16.msra.mxu0 0
    %900 = vmatprep.subr.bf16.mxu0 0
    %901 = vmatpush2.bf16.msra.mxu0 0
    %902 = vmatprep.subr.bf16.mxu0 0
    %903 = vmatpush2.bf16.msra.mxu0 0
    %904 = vmatprep.subr.bf16.mxu0 0
    %905 = vmatpush2.bf16.msra.mxu0 0
    %906 = vmatprep.subr.bf16.mxu0 0
    %907 = vmatpush2.bf16.msra.mxu0 0
    %908 = vmatprep.subr.bf16.mxu0 0
    %909 = vmatpush2.bf16.msra.mxu0 0
    %910 = vmatprep.subr.bf16.mxu0 0
    %911 = vmatpush2.bf16.msra.mxu0 0
    %912 = vmatprep.subr.bf16.mxu0 0
    %913 = vmatpush2.bf16.msra.mxu0 0
    %914 = vmatprep.mubr.bf16.mxu0 0
    %915 = vmatmul.mubr.bf16.gmra.mxu0 %v835
    %v916 = vpop.f32.mrf.mxu0
    %v917 = vadd.f32 0.0, %v916
    %v918 = vpop.f32.mrf.mxu0
    %v919 = vpop.f32.mrf.mxu0
    %v920 = vadd.f32 0.0, %v919
    %v921 = vpop.f32.mrf.mxu0
    %922 = vmatprep.mubr.bf16.mxu0 0
    %923 = vmatmul.mubr.bf16.gmra.mxu0 %v838
    %v924 = vpop.f32.mrf.mxu0
    %v925 = vadd.f32 0.0, %v924
    %v926 = vpop.f32.mrf.mxu0
    %v927 = vpop.f32.mrf.mxu0
    %v928 = vadd.f32 0.0, %v927
    %v929 = vpop.f32.mrf.mxu0
    %930 = vmatprep.mubr.bf16.mxu0 0
    %931 = vmatmul.mubr.bf16.gmra.mxu0 %v841
    %v932 = vpop.f32.mrf.mxu0
    %v933 = vadd.f32 0.0, %v932
    %v934 = vpop.f32.mrf.mxu0
    %v935 = vpop.f32.mrf.mxu0
    %v936 = vadd.f32 0.0, %v935
    %v937 = vpop.f32.mrf.mxu0
    %938 = vmatprep.mubr.bf16.mxu0 0
    %939 = vmatmul.mubr.bf16.gmra.mxu0 %v844
    %v940 = vpop.f32.mrf.mxu0
    %v941 = vadd.f32 0.0, %v940
    %v942 = vpop.f32.mrf.mxu0
    %v943 = vpop.f32.mrf.mxu0
    %v944 = vadd.f32 0.0, %v943
    %v945 = vpop.f32.mrf.mxu0
    %946 = vmatprep.mubr.bf16.mxu0 0
    %947 = vmatmul.mubr.bf16.gmra.mxu0 %v847
    %v948 = vpop.f32.mrf.mxu0
    %v949 = vadd.f32 0.0, %v948
    %v950 = vpop.f32.mrf.mxu0
    %v951 = vpop.f32.mrf.mxu0
    %v952 = vadd.f32 0.0, %v951
    %v953 = vpop.f32.mrf.mxu0
    %954 = vmatprep.mubr.bf16.mxu0 0
    %955 = vmatmul.mubr.bf16.gmra.mxu0 %v850
    %v956 = vpop.f32.mrf.mxu0
    %v957 = vadd.f32 0.0, %v956
    %v958 = vpop.f32.mrf.mxu0
    %v959 = vpop.f32.mrf.mxu0
    %v960 = vadd.f32 0.0, %v959
    %v961 = vpop.f32.mrf.mxu0
    %962 = vmatprep.mubr.bf16.mxu0 0
    %963 = vmatmul.mubr.bf16.gmra.mxu0 %v853
    %v964 = vpop.f32.mrf.mxu0
    %v965 = vadd.f32 0.0, %v964
    %v966 = vpop.f32.mrf.mxu0
    %v967 = vpop.f32.mrf.mxu0
    %v968 = vadd.f32 0.0, %v967
    %v969 = vpop.f32.mrf.mxu0
    %970 = vmatprep.mubr.bf16.mxu0 0
    %971 = vmatmul.mubr.bf16.gmra.mxu0 %v856
    %v972 = vpop.f32.mrf.mxu0
    %v973 = vadd.f32 0.0, %v972
    %v974 = vpop.f32.mrf.mxu0
    %v975 = vpop.f32.mrf.mxu0
    %v976 = vadd.f32 0.0, %v975
    %v977 = vpop.f32.mrf.mxu0
    %978 = vmatprep.mubr.bf16.mxu0 0
    %979 = vmatmul.mubr.bf16.gmra.mxu0 %v859
    %v980 = vpop.f32.mrf.mxu0
    %v981 = vadd.f32 0.0, %v980
    %v982 = vpop.f32.mrf.mxu0
    %v983 = vpop.f32.mrf.mxu0
    %v984 = vadd.f32 0.0, %v983
    %v985 = vpop.f32.mrf.mxu0
    %986 = vmatprep.mubr.bf16.mxu0 0
    %987 = vmatmul.mubr.bf16.gmra.mxu0 %v862
    %v988 = vpop.f32.mrf.mxu0
    %v989 = vadd.f32 0.0, %v988
    %v990 = vpop.f32.mrf.mxu0
    %v991 = vpop.f32.mrf.mxu0
    %v992 = vadd.f32 0.0, %v991
    %v993 = vpop.f32.mrf.mxu0
    %994 = vmatprep.mubr.bf16.mxu0 0
    %995 = vmatmul.mubr.bf16.gmra.mxu0 %v865
    %v996 = vpop.f32.mrf.mxu0
    %v997 = vadd.f32 0.0, %v996
    %v998 = vpop.f32.mrf.mxu0
    %v999 = vpop.f32.mrf.mxu0
    %v1000 = vadd.f32 0.0, %v999
    %v1001 = vpop.f32.mrf.mxu0
    %1002 = vmatprep.mubr.bf16.mxu0 0
    %1003 = vmatmul.mubr.bf16.gmra.mxu0 %v868
    %v1004 = vpop.f32.mrf.mxu0
    %v1005 = vadd.f32 0.0, %v1004
    %v1006 = vpop.f32.mrf.mxu0
    %v1007 = vpop.f32.mrf.mxu0
    %v1008 = vadd.f32 0.0, %v1007
    %v1009 = vpop.f32.mrf.mxu0
    %1010 = vmatprep.mubr.bf16.mxu0 0
    %1011 = vmatmul.mubr.bf16.gmra.mxu0 %v871
    %v1012 = vpop.f32.mrf.mxu0
    %v1013 = vadd.f32 0.0, %v1012
    %v1014 = vpop.f32.mrf.mxu0
    %v1015 = vpop.f32.mrf.mxu0
    %v1016 = vadd.f32 0.0, %v1015
    %v1017 = vpop.f32.mrf.mxu0
    %1018 = vmatprep.mubr.bf16.mxu0 0
    %1019 = vmatmul.mubr.bf16.gmra.mxu0 %v874
    %v1020 = vpop.f32.mrf.mxu0
    %v1021 = vadd.f32 0.0, %v1020
    %v1022 = vpop.f32.mrf.mxu0
    %v1023 = vpop.f32.mrf.mxu0
    %v1024 = vadd.f32 0.0, %v1023
    %v1025 = vpop.f32.mrf.mxu0
    %1026 = vmatprep.mubr.bf16.mxu0 0
    %1027 = vmatmul.mubr.bf16.gmra.mxu0 %v877
    %v1028 = vpop.f32.mrf.mxu0
    %v1029 = vadd.f32 0.0, %v1028
    %v1030 = vpop.f32.mrf.mxu0
    %v1031 = vpop.f32.mrf.mxu0
    %v1032 = vadd.f32 0.0, %v1031
    %v1033 = vpop.f32.mrf.mxu0
    %1034 = vmatprep.mubr.bf16.mxu0 0
    %1035 = vmatmul.mubr.bf16.gmra.mxu0 %v880
    %v1036 = vpop.f32.mrf.mxu0
    %v1037 = vadd.f32 0.0, %v1036
    %v1038 = vpop.f32.mrf.mxu0
    %v1039 = vpop.f32.mrf.mxu0
    %v1040 = vadd.f32 0.0, %v1039
    %v1041 = vpop.f32.mrf.mxu0
    %1042 = vdwg.mxu0
    %v1043 = vpack.c.bf16 %v920, %v917
    %v1044 = vpack.c.bf16 %v928, %v925
    %v1045 = vpack.c.bf16 %v936, %v933
    %v1046 = vpack.c.bf16 %v944, %v941
    %v1047 = vpack.c.bf16 %v952, %v949
    %v1048 = vpack.c.bf16 %v960, %v957
    %v1049 = vpack.c.bf16 %v968, %v965
    %v1050 = vpack.c.bf16 %v976, %v973
    %v1051 = vpack.c.bf16 %v984, %v981
    %v1052 = vpack.c.bf16 %v992, %v989
    %v1053 = vpack.c.bf16 %v1000, %v997
    %v1054 = vpack.c.bf16 %v1008, %v1005
    %v1055 = vpack.c.bf16 %v1016, %v1013
    %v1056 = vpack.c.bf16 %v1024, %v1021
    %v1057 = vpack.c.bf16 %v1032, %v1029
    %v1058 = vpack.c.bf16 %v1040, %v1037
    %v1059 = vld [vmem:[%s7] sm:$0x1]
    %v1061 = vlaneseq
    %v1062 = vshrl.u32 %v1061, 7
    %v1063 = vsub.s32 0, %v1062
    %v1064 = vrot.slane %v1059, %v1063
    %1066 = vmatprep.subr.bf16.mxu0 0
    %1067 = vmatpush1.bf16.msra.mxu0 %v1050
    %1068 = vmatprep.subr.bf16.mxu0 0
    %1069 = vmatpush1.bf16.msra.mxu0 %v1049
    %1070 = vmatprep.subr.bf16.mxu0 0
    %1071 = vmatpush1.bf16.msra.mxu0 %v1048
    %1072 = vmatprep.subr.bf16.mxu0 0
    %1073 = vmatpush1.bf16.msra.mxu0 %v1047
    %1074 = vmatprep.subr.bf16.mxu0 0
    %1075 = vmatpush1.bf16.msra.mxu0 %v1046
    %1076 = vmatprep.subr.bf16.mxu0 0
    %1077 = vmatpush1.bf16.msra.mxu0 %v1045
    %1078 = vmatprep.subr.bf16.mxu0 0
    %1079 = vmatpush1.bf16.msra.mxu0 %v1044
    %1080 = vmatprep.subr.bf16.mxu0 0
    %1081 = vmatpush1.bf16.msra.mxu0 %v1043
    %1082 = vmatprep.subr.bf16.mxu0 0
    %1083 = vmatpush2.bf16.msra.mxu0 %v1058
    %1084 = vmatprep.subr.bf16.mxu0 0
    %1085 = vmatpush2.bf16.msra.mxu0 %v1057
    %1086 = vmatprep.subr.bf16.mxu0 0
    %1087 = vmatpush2.bf16.msra.mxu0 %v1056
    %1088 = vmatprep.subr.bf16.mxu0 0
    %1089 = vmatpush2.bf16.msra.mxu0 %v1055
    %1090 = vmatprep.subr.bf16.mxu0 0
    %1091 = vmatpush2.bf16.msra.mxu0 %v1054
    %1092 = vmatprep.subr.bf16.mxu0 0
    %1093 = vmatpush2.bf16.msra.mxu0 %v1053
    %1094 = vmatprep.subr.bf16.mxu0 0
    %1095 = vmatpush2.bf16.msra.mxu0 %v1052
    %1096 = vmatprep.subr.bf16.mxu0 0
    %1097 = vmatpush2.bf16.msra.mxu0 %v1051
    %1098 = vmatprep.mubr.bf16.mxu0 %v529
    %1099 = vmatmul.mubr.bf16.gmra.mxu0 %v528
    %v1100 = vpop.f32.mrf.mxu0
    %v1101 = vadd.f32 %v1064, %v1100
    %v1102 = vpop.f32.mrf.mxu0
    %v1103 = vpop.f32.mrf.mxu0
    %v1104 = vadd.f32 %v1064, %v1103
    %v1105 = vpop.f32.mrf.mxu0
    %1106 = vmatprep.mubr.bf16.mxu0 %v531
    %1107 = vmatmul.mubr.bf16.gmra.mxu0 %v530
    %v1108 = vpop.f32.mrf.mxu0
    %v1109 = vadd.f32 %v1064, %v1108
    %v1110 = vpop.f32.mrf.mxu0
    %v1111 = vpop.f32.mrf.mxu0
    %v1112 = vadd.f32 %v1064, %v1111
    %v1113 = vpop.f32.mrf.mxu0
    %1114 = vmatprep.mubr.bf16.mxu0 %v533
    %1115 = vmatmul.mubr.bf16.gmra.mxu0 %v532
    %v1116 = vpop.f32.mrf.mxu0
    %v1117 = vadd.f32 %v1064, %v1116
    %v1118 = vpop.f32.mrf.mxu0
    %v1119 = vpop.f32.mrf.mxu0
    %v1120 = vadd.f32 %v1064, %v1119
    %v1121 = vpop.f32.mrf.mxu0
    %1122 = vmatprep.mubr.bf16.mxu0 %v535
    %1123 = vmatmul.mubr.bf16.gmra.mxu0 %v534
    %v1124 = vpop.f32.mrf.mxu0
    %v1125 = vadd.f32 %v1064, %v1124
    %v1126 = vpop.f32.mrf.mxu0
    %v1127 = vpop.f32.mrf.mxu0
    %v1128 = vadd.f32 %v1064, %v1127
    %v1129 = vpop.f32.mrf.mxu0
    %1130 = vmatprep.mubr.bf16.mxu0 %v537
    %1131 = vmatmul.mubr.bf16.gmra.mxu0 %v536
    %v1132 = vpop.f32.mrf.mxu0
    %v1133 = vadd.f32 %v1064, %v1132
    %v1134 = vpop.f32.mrf.mxu0
    %v1135 = vpop.f32.mrf.mxu0
    %v1136 = vadd.f32 %v1064, %v1135
    %v1137 = vpop.f32.mrf.mxu0
    %1138 = vmatprep.mubr.bf16.mxu0 %v539
    %1139 = vmatmul.mubr.bf16.gmra.mxu0 %v538
    %v1140 = vpop.f32.mrf.mxu0
    %v1141 = vadd.f32 %v1064, %v1140
    %v1142 = vpop.f32.mrf.mxu0
    %v1143 = vpop.f32.mrf.mxu0
    %v1144 = vadd.f32 %v1064, %v1143
    %v1145 = vpop.f32.mrf.mxu0
    %1146 = vmatprep.mubr.bf16.mxu0 %v541
    %1147 = vmatmul.mubr.bf16.gmra.mxu0 %v540
    %v1148 = vpop.f32.mrf.mxu0
    %v1149 = vadd.f32 %v1064, %v1148
    %v1150 = vpop.f32.mrf.mxu0
    %v1151 = vpop.f32.mrf.mxu0
    %v1152 = vadd.f32 %v1064, %v1151
    %v1153 = vpop.f32.mrf.mxu0
    %1154 = vmatprep.mubr.bf16.mxu0 %v543
    %1155 = vmatmul.mubr.bf16.gmra.mxu0 %v542
    %v1156 = vpop.f32.mrf.mxu0
    %v1157 = vadd.f32 %v1064, %v1156
    %v1158 = vpop.f32.mrf.mxu0
    %v1159 = vpop.f32.mrf.mxu0
    %v1160 = vadd.f32 %v1064, %v1159
    %v1161 = vpop.f32.mrf.mxu0
    %1162 = vmatprep.mubr.bf16.mxu0 %v545
    %1163 = vmatmul.mubr.bf16.gmra.mxu0 %v544
    %v1164 = vpop.f32.mrf.mxu0
    %v1165 = vadd.f32 %v1064, %v1164
    %v1166 = vpop.f32.mrf.mxu0
    %v1167 = vpop.f32.mrf.mxu0
    %v1168 = vadd.f32 %v1064, %v1167
    %v1169 = vpop.f32.mrf.mxu0
    %1170 = vmatprep.mubr.bf16.mxu0 %v547
    %1171 = vmatmul.mubr.bf16.gmra.mxu0 %v546
    %v1172 = vpop.f32.mrf.mxu0
    %v1173 = vadd.f32 %v1064, %v1172
    %v1174 = vpop.f32.mrf.mxu0
    %v1175 = vpop.f32.mrf.mxu0
    %v1176 = vadd.f32 %v1064, %v1175
    %v1177 = vpop.f32.mrf.mxu0
    %1178 = vmatprep.mubr.bf16.mxu0 %v549
    %1179 = vmatmul.mubr.bf16.gmra.mxu0 %v548
    %v1180 = vpop.f32.mrf.mxu0
    %v1181 = vadd.f32 %v1064, %v1180
    %v1182 = vpop.f32.mrf.mxu0
    %v1183 = vpop.f32.mrf.mxu0
    %v1184 = vadd.f32 %v1064, %v1183
    %v1185 = vpop.f32.mrf.mxu0
    %1186 = vmatprep.mubr.bf16.mxu0 %v551
    %1187 = vmatmul.mubr.bf16.gmra.mxu0 %v550
    %v1188 = vpop.f32.mrf.mxu0
    %v1189 = vadd.f32 %v1064, %v1188
    %v1190 = vpop.f32.mrf.mxu0
    %v1191 = vpop.f32.mrf.mxu0
    %v1192 = vadd.f32 %v1064, %v1191
    %v1193 = vpop.f32.mrf.mxu0
    %1194 = vmatprep.mubr.bf16.mxu0 %v553
    %1195 = vmatmul.mubr.bf16.gmra.mxu0 %v552
    %v1196 = vpop.f32.mrf.mxu0
    %v1197 = vadd.f32 %v1064, %v1196
    %v1198 = vpop.f32.mrf.mxu0
    %v1199 = vpop.f32.mrf.mxu0
    %v1200 = vadd.f32 %v1064, %v1199
    %v1201 = vpop.f32.mrf.mxu0
    %1202 = vmatprep.mubr.bf16.mxu0 %v555
    %1203 = vmatmul.mubr.bf16.gmra.mxu0 %v554
    %v1204 = vpop.f32.mrf.mxu0
    %v1205 = vadd.f32 %v1064, %v1204
    %v1206 = vpop.f32.mrf.mxu0
    %v1207 = vpop.f32.mrf.mxu0
    %v1208 = vadd.f32 %v1064, %v1207
    %v1209 = vpop.f32.mrf.mxu0
    %1210 = vmatprep.mubr.bf16.mxu0 %v557
    %1211 = vmatmul.mubr.bf16.gmra.mxu0 %v556
    %v1212 = vpop.f32.mrf.mxu0
    %v1213 = vadd.f32 %v1064, %v1212
    %v1214 = vpop.f32.mrf.mxu0
    %v1215 = vpop.f32.mrf.mxu0
    %v1216 = vadd.f32 %v1064, %v1215
    %v1217 = vpop.f32.mrf.mxu0
    %1218 = vmatprep.mubr.bf16.mxu0 %v559
    %1219 = vmatmul.mubr.bf16.gmra.mxu0 %v558
    %v1220 = vpop.f32.mrf.mxu0
    %v1221 = vadd.f32 %v1064, %v1220
    %v1222 = vpop.f32.mrf.mxu0
    %v1223 = vpop.f32.mrf.mxu0
    %v1224 = vadd.f32 %v1064, %v1223
    %v1225 = vpop.f32.mrf.mxu0
    %1226 = vdwg.mxu0
    %v1227 = vmax.f32 %v1101, 0.0
    %v1228 = vmax.f32 %v1104, 0.0
    %v1229 = vmax.f32 %v1109, 0.0
    %v1230 = vmax.f32 %v1112, 0.0
    %v1231 = vmax.f32 %v1117, 0.0
    %v1232 = vmax.f32 %v1120, 0.0
    %v1233 = vmax.f32 %v1125, 0.0
    %v1234 = vmax.f32 %v1128, 0.0
    %v1235 = vmax.f32 %v1133, 0.0
    %v1236 = vmax.f32 %v1136, 0.0
    %v1237 = vmax.f32 %v1141, 0.0
    %v1238 = vmax.f32 %v1144, 0.0
    %v1239 = vmax.f32 %v1149, 0.0
    %v1240 = vmax.f32 %v1152, 0.0
    %v1241 = vmax.f32 %v1157, 0.0
    %v1242 = vmax.f32 %v1160, 0.0
    %v1243 = vmax.f32 %v1165, 0.0
    %v1244 = vmax.f32 %v1168, 0.0
    %v1245 = vmax.f32 %v1173, 0.0
    %v1246 = vmax.f32 %v1176, 0.0
    %v1247 = vmax.f32 %v1181, 0.0
    %v1248 = vmax.f32 %v1184, 0.0
    %v1249 = vmax.f32 %v1189, 0.0
    %v1250 = vmax.f32 %v1192, 0.0
    %v1251 = vmax.f32 %v1197, 0.0
    %v1252 = vmax.f32 %v1200, 0.0
    %v1253 = vmax.f32 %v1205, 0.0
    %v1254 = vmax.f32 %v1208, 0.0
    %v1255 = vmax.f32 %v1213, 0.0
    %v1256 = vmax.f32 %v1216, 0.0
    %v1257 = vmax.f32 %v1221, 0.0
    %v1258 = vmax.f32 %v1224, 0.0
    %v1259 = vpack.c.bf16 %v1228, %v1227
    %v1260 = vpack.c.bf16 %v1230, %v1229
    %v1261 = vpack.c.bf16 %v1232, %v1231
    %v1262 = vpack.c.bf16 %v1234, %v1233
    %v1263 = vpack.c.bf16 %v1236, %v1235
    %v1264 = vpack.c.bf16 %v1238, %v1237
    %v1265 = vpack.c.bf16 %v1240, %v1239
    %v1266 = vpack.c.bf16 %v1242, %v1241
    %v1267 = vpack.c.bf16 %v1244, %v1243
    %v1268 = vpack.c.bf16 %v1246, %v1245
    %v1269 = vpack.c.bf16 %v1248, %v1247
    %v1270 = vpack.c.bf16 %v1250, %v1249
    %v1271 = vpack.c.bf16 %v1252, %v1251
    %v1272 = vpack.c.bf16 %v1254, %v1253
    %v1273 = vpack.c.bf16 %v1256, %v1255
    %v1274 = vpack.c.bf16 %v1258, %v1257
    %v1275 = vld [vmem:[%s8] sm:$0xf]
    %v1276 = vld [vmem:[%s8 + $0x4] sm:$0xf]
    %v1277 = vld [vmem:[%s8 + $0x8] sm:$0xf]
    %v1278 = vld [vmem:[%s8 + $0xc] sm:$0xf]
    %v1279 = vld [vmem:[%s8 + $0x10] sm:$0xf]
    %v1280 = vld [vmem:[%s8 + $0x14] sm:$0xf]
    %v1281 = vld [vmem:[%s8 + $0x18] sm:$0xf]
    %v1282 = vld [vmem:[%s8 + $0x1c] sm:$0xf]
    %v1291 = vunpack.c.l.b16 %v1275
    %v1292 = vunpack.c.l.b16 %v1276
    %v1293 = vunpack.c.l.b16 %v1277
    %v1294 = vunpack.c.l.b16 %v1278
    %v1295 = vunpack.c.l.b16 %v1279
    %v1296 = vunpack.c.l.b16 %v1280
    %v1297 = vunpack.c.l.b16 %v1281
    %v1298 = vunpack.c.l.b16 %v1282
    %v1299 = vpack.c.b16 %v1292, %v1291
    %v1300 = vpack.c.b16 %v1294, %v1293
    %v1301 = vpack.c.b16 %v1296, %v1295
    %v1302 = vpack.c.b16 %v1298, %v1297
    %v1308 = vsel %vm833, %v1259, 0
    %v1311 = vsel %vm833, %v1260, 0
    %v1314 = vsel %vm833, %v1261, 0
    %v1317 = vsel %vm833, %v1262, 0
    %v1320 = vsel %vm833, %v1263, 0
    %v1323 = vsel %vm833, %v1264, 0
    %v1326 = vsel %vm833, %v1265, 0
    %v1329 = vsel %vm833, %v1266, 0
    %v1332 = vsel %vm833, %v1267, 0
    %v1335 = vsel %vm833, %v1268, 0
    %v1338 = vsel %vm833, %v1269, 0
    %v1341 = vsel %vm833, %v1270, 0
    %v1344 = vsel %vm833, %v1271, 0
    %v1347 = vsel %vm833, %v1272, 0
    %v1350 = vsel %vm833, %v1273, 0
    %v1353 = vsel %vm833, %v1274, 0
    %1355 = vmatprep.subr.bf16.mxu0 0
    %1356 = vmatpush1.bf16.msra.mxu0 0
    %1357 = vmatprep.subr.bf16.mxu0 0
    %1358 = vmatpush1.bf16.msra.mxu0 0
    %1359 = vmatprep.subr.bf16.mxu0 0
    %1360 = vmatpush1.bf16.msra.mxu0 0
    %1361 = vmatprep.subr.bf16.mxu0 0
    %1362 = vmatpush1.bf16.msra.mxu0 0
    %1363 = vmatprep.subr.bf16.mxu0 0
    %1364 = vmatpush1.bf16.msra.mxu0 %v1302
    %1365 = vmatprep.subr.bf16.mxu0 0
    %1366 = vmatpush1.bf16.msra.mxu0 %v1301
    %1367 = vmatprep.subr.bf16.mxu0 0
    %1368 = vmatpush1.bf16.msra.mxu0 %v1300
    %1369 = vmatprep.subr.bf16.mxu0 0
    %1370 = vmatpush1.bf16.msra.mxu0 %v1299
    %1371 = vmatprep.subr.bf16.mxu0 0
    %1372 = vmatpush2.bf16.msra.mxu0 0
    %1373 = vmatprep.subr.bf16.mxu0 0
    %1374 = vmatpush2.bf16.msra.mxu0 0
    %1375 = vmatprep.subr.bf16.mxu0 0
    %1376 = vmatpush2.bf16.msra.mxu0 0
    %1377 = vmatprep.subr.bf16.mxu0 0
    %1378 = vmatpush2.bf16.msra.mxu0 0
    %1379 = vmatprep.subr.bf16.mxu0 0
    %1380 = vmatpush2.bf16.msra.mxu0 0
    %1381 = vmatprep.subr.bf16.mxu0 0
    %1382 = vmatpush2.bf16.msra.mxu0 0
    %1383 = vmatprep.subr.bf16.mxu0 0
    %1384 = vmatpush2.bf16.msra.mxu0 0
    %1385 = vmatprep.subr.bf16.mxu0 0
    %1386 = vmatpush2.bf16.msra.mxu0 0
    %1387 = vmatprep.mubr.bf16.mxu0 0
    %1388 = vmatmul.mubr.bf16.gmra.mxu0 %v1308
    %v1389 = vpop.f32.mrf.mxu0
    %v1390 = vadd.f32 0.0, %v1389
    %v1391 = vpop.f32.mrf.mxu0
    %v1392 = vpop.f32.mrf.mxu0
    %v1393 = vadd.f32 0.0, %v1392
    %v1394 = vpop.f32.mrf.mxu0
    %1395 = vmatprep.mubr.bf16.mxu0 0
    %1396 = vmatmul.mubr.bf16.gmra.mxu0 %v1311
    %v1397 = vpop.f32.mrf.mxu0
    %v1398 = vadd.f32 0.0, %v1397
    %v1399 = vpop.f32.mrf.mxu0
    %v1400 = vpop.f32.mrf.mxu0
    %v1401 = vadd.f32 0.0, %v1400
    %v1402 = vpop.f32.mrf.mxu0
    %1403 = vmatprep.mubr.bf16.mxu0 0
    %1404 = vmatmul.mubr.bf16.gmra.mxu0 %v1314
    %v1405 = vpop.f32.mrf.mxu0
    %v1406 = vadd.f32 0.0, %v1405
    %v1407 = vpop.f32.mrf.mxu0
    %v1408 = vpop.f32.mrf.mxu0
    %v1409 = vadd.f32 0.0, %v1408
    %v1410 = vpop.f32.mrf.mxu0
    %1411 = vmatprep.mubr.bf16.mxu0 0
    %1412 = vmatmul.mubr.bf16.gmra.mxu0 %v1317
    %v1413 = vpop.f32.mrf.mxu0
    %v1414 = vadd.f32 0.0, %v1413
    %v1415 = vpop.f32.mrf.mxu0
    %v1416 = vpop.f32.mrf.mxu0
    %v1417 = vadd.f32 0.0, %v1416
    %v1418 = vpop.f32.mrf.mxu0
    %1419 = vmatprep.mubr.bf16.mxu0 0
    %1420 = vmatmul.mubr.bf16.gmra.mxu0 %v1320
    %v1421 = vpop.f32.mrf.mxu0
    %v1422 = vadd.f32 0.0, %v1421
    %v1423 = vpop.f32.mrf.mxu0
    %v1424 = vpop.f32.mrf.mxu0
    %v1425 = vadd.f32 0.0, %v1424
    %v1426 = vpop.f32.mrf.mxu0
    %1427 = vmatprep.mubr.bf16.mxu0 0
    %1428 = vmatmul.mubr.bf16.gmra.mxu0 %v1323
    %v1429 = vpop.f32.mrf.mxu0
    %v1430 = vadd.f32 0.0, %v1429
    %v1431 = vpop.f32.mrf.mxu0
    %v1432 = vpop.f32.mrf.mxu0
    %v1433 = vadd.f32 0.0, %v1432
    %v1434 = vpop.f32.mrf.mxu0
    %1435 = vmatprep.mubr.bf16.mxu0 0
    %1436 = vmatmul.mubr.bf16.gmra.mxu0 %v1326
    %v1437 = vpop.f32.mrf.mxu0
    %v1438 = vadd.f32 0.0, %v1437
    %v1439 = vpop.f32.mrf.mxu0
    %v1440 = vpop.f32.mrf.mxu0
    %v1441 = vadd.f32 0.0, %v1440
    %v1442 = vpop.f32.mrf.mxu0
    %1443 = vmatprep.mubr.bf16.mxu0 0
    %1444 = vmatmul.mubr.bf16.gmra.mxu0 %v1329
    %v1445 = vpop.f32.mrf.mxu0
    %v1446 = vadd.f32 0.0, %v1445
    %v1447 = vpop.f32.mrf.mxu0
    %v1448 = vpop.f32.mrf.mxu0
    %v1449 = vadd.f32 0.0, %v1448
    %v1450 = vpop.f32.mrf.mxu0
    %1451 = vmatprep.mubr.bf16.mxu0 0
    %1452 = vmatmul.mubr.bf16.gmra.mxu0 %v1332
    %v1453 = vpop.f32.mrf.mxu0
    %v1454 = vadd.f32 0.0, %v1453
    %v1455 = vpop.f32.mrf.mxu0
    %v1456 = vpop.f32.mrf.mxu0
    %v1457 = vadd.f32 0.0, %v1456
    %v1458 = vpop.f32.mrf.mxu0
    %1459 = vmatprep.mubr.bf16.mxu0 0
    %1460 = vmatmul.mubr.bf16.gmra.mxu0 %v1335
    %v1461 = vpop.f32.mrf.mxu0
    %v1462 = vadd.f32 0.0, %v1461
    %v1463 = vpop.f32.mrf.mxu0
    %v1464 = vpop.f32.mrf.mxu0
    %v1465 = vadd.f32 0.0, %v1464
    %v1466 = vpop.f32.mrf.mxu0
    %1467 = vmatprep.mubr.bf16.mxu0 0
    %1468 = vmatmul.mubr.bf16.gmra.mxu0 %v1338
    %v1469 = vpop.f32.mrf.mxu0
    %v1470 = vadd.f32 0.0, %v1469
    %v1471 = vpop.f32.mrf.mxu0
    %v1472 = vpop.f32.mrf.mxu0
    %v1473 = vadd.f32 0.0, %v1472
    %v1474 = vpop.f32.mrf.mxu0
    %1475 = vmatprep.mubr.bf16.mxu0 0
    %1476 = vmatmul.mubr.bf16.gmra.mxu0 %v1341
    %v1477 = vpop.f32.mrf.mxu0
    %v1478 = vadd.f32 0.0, %v1477
    %v1479 = vpop.f32.mrf.mxu0
    %v1480 = vpop.f32.mrf.mxu0
    %v1481 = vadd.f32 0.0, %v1480
    %v1482 = vpop.f32.mrf.mxu0
    %1483 = vmatprep.mubr.bf16.mxu0 0
    %1484 = vmatmul.mubr.bf16.gmra.mxu0 %v1344
    %v1485 = vpop.f32.mrf.mxu0
    %v1486 = vadd.f32 0.0, %v1485
    %v1487 = vpop.f32.mrf.mxu0
    %v1488 = vpop.f32.mrf.mxu0
    %v1489 = vadd.f32 0.0, %v1488
    %v1490 = vpop.f32.mrf.mxu0
    %1491 = vmatprep.mubr.bf16.mxu0 0
    %1492 = vmatmul.mubr.bf16.gmra.mxu0 %v1347
    %v1493 = vpop.f32.mrf.mxu0
    %v1494 = vadd.f32 0.0, %v1493
    %v1495 = vpop.f32.mrf.mxu0
    %v1496 = vpop.f32.mrf.mxu0
    %v1497 = vadd.f32 0.0, %v1496
    %v1498 = vpop.f32.mrf.mxu0
    %1499 = vmatprep.mubr.bf16.mxu0 0
    %1500 = vmatmul.mubr.bf16.gmra.mxu0 %v1350
    %v1501 = vpop.f32.mrf.mxu0
    %v1502 = vadd.f32 0.0, %v1501
    %v1503 = vpop.f32.mrf.mxu0
    %v1504 = vpop.f32.mrf.mxu0
    %v1505 = vadd.f32 0.0, %v1504
    %v1506 = vpop.f32.mrf.mxu0
    %1507 = vmatprep.mubr.bf16.mxu0 0
    %1508 = vmatmul.mubr.bf16.gmra.mxu0 %v1353
    %v1509 = vpop.f32.mrf.mxu0
    %v1510 = vadd.f32 0.0, %v1509
    %v1511 = vpop.f32.mrf.mxu0
    %v1512 = vpop.f32.mrf.mxu0
    %v1513 = vadd.f32 0.0, %v1512
    %v1514 = vpop.f32.mrf.mxu0
    %1515 = vdwg.mxu0
    %v1516 = vpack.c.bf16 %v1393, %v1390
    %v1517 = vpack.c.bf16 %v1401, %v1398
    %v1518 = vpack.c.bf16 %v1409, %v1406
    %v1519 = vpack.c.bf16 %v1417, %v1414
    %v1520 = vpack.c.bf16 %v1425, %v1422
    %v1521 = vpack.c.bf16 %v1433, %v1430
    %v1522 = vpack.c.bf16 %v1441, %v1438
    %v1523 = vpack.c.bf16 %v1449, %v1446
    %v1524 = vpack.c.bf16 %v1457, %v1454
    %v1525 = vpack.c.bf16 %v1465, %v1462
    %v1526 = vpack.c.bf16 %v1473, %v1470
    %v1527 = vpack.c.bf16 %v1481, %v1478
    %v1528 = vpack.c.bf16 %v1489, %v1486
    %v1529 = vpack.c.bf16 %v1497, %v1494
    %v1530 = vpack.c.bf16 %v1505, %v1502
    %v1531 = vpack.c.bf16 %v1513, %v1510
    %v1532 = vld [vmem:[%s9] sm:$0x1]
    %v1534 = vlaneseq
    %v1535 = vshrl.u32 %v1534, 7
    %v1536 = vsub.s32 0, %v1535
    %v1537 = vrot.slane %v1532, %v1536
    %1539 = vmatprep.subr.bf16.mxu0 0
    %1540 = vmatpush1.bf16.msra.mxu0 %v1523
    %1541 = vmatprep.subr.bf16.mxu0 0
    %1542 = vmatpush1.bf16.msra.mxu0 %v1522
    %1543 = vmatprep.subr.bf16.mxu0 0
    %1544 = vmatpush1.bf16.msra.mxu0 %v1521
    %1545 = vmatprep.subr.bf16.mxu0 0
    %1546 = vmatpush1.bf16.msra.mxu0 %v1520
    %1547 = vmatprep.subr.bf16.mxu0 0
    %1548 = vmatpush1.bf16.msra.mxu0 %v1519
    %1549 = vmatprep.subr.bf16.mxu0 0
    %1550 = vmatpush1.bf16.msra.mxu0 %v1518
    %1551 = vmatprep.subr.bf16.mxu0 0
    %1552 = vmatpush1.bf16.msra.mxu0 %v1517
    %1553 = vmatprep.subr.bf16.mxu0 0
    %1554 = vmatpush1.bf16.msra.mxu0 %v1516
    %1555 = vmatprep.subr.bf16.mxu0 0
    %1556 = vmatpush2.bf16.msra.mxu0 %v1531
    %1557 = vmatprep.subr.bf16.mxu0 0
    %1558 = vmatpush2.bf16.msra.mxu0 %v1530
    %1559 = vmatprep.subr.bf16.mxu0 0
    %1560 = vmatpush2.bf16.msra.mxu0 %v1529
    %1561 = vmatprep.subr.bf16.mxu0 0
    %1562 = vmatpush2.bf16.msra.mxu0 %v1528
    %1563 = vmatprep.subr.bf16.mxu0 0
    %1564 = vmatpush2.bf16.msra.mxu0 %v1527
    %1565 = vmatprep.subr.bf16.mxu0 0
    %1566 = vmatpush2.bf16.msra.mxu0 %v1526
    %1567 = vmatprep.subr.bf16.mxu0 0
    %1568 = vmatpush2.bf16.msra.mxu0 %v1525
    %1569 = vmatprep.subr.bf16.mxu0 0
    %1570 = vmatpush2.bf16.msra.mxu0 %v1524
    %1571 = vmatprep.mubr.bf16.mxu0 %v529
    %1572 = vmatmul.mubr.bf16.gmra.mxu0 %v528
    %v1573 = vpop.f32.mrf.mxu0
    %v1574 = vadd.f32 %v1537, %v1573
    %v1575 = vpop.f32.mrf.mxu0
    %v1576 = vpop.f32.mrf.mxu0
    %v1577 = vadd.f32 %v1537, %v1576
    %v1578 = vpop.f32.mrf.mxu0
    %1579 = vmatprep.mubr.bf16.mxu0 %v531
    %1580 = vmatmul.mubr.bf16.gmra.mxu0 %v530
    %v1581 = vpop.f32.mrf.mxu0
    %v1582 = vadd.f32 %v1537, %v1581
    %v1583 = vpop.f32.mrf.mxu0
    %v1584 = vpop.f32.mrf.mxu0
    %v1585 = vadd.f32 %v1537, %v1584
    %v1586 = vpop.f32.mrf.mxu0
    %1587 = vmatprep.mubr.bf16.mxu0 %v533
    %1588 = vmatmul.mubr.bf16.gmra.mxu0 %v532
    %v1589 = vpop.f32.mrf.mxu0
    %v1590 = vadd.f32 %v1537, %v1589
    %v1591 = vpop.f32.mrf.mxu0
    %v1592 = vpop.f32.mrf.mxu0
    %v1593 = vadd.f32 %v1537, %v1592
    %v1594 = vpop.f32.mrf.mxu0
    %1595 = vmatprep.mubr.bf16.mxu0 %v535
    %1596 = vmatmul.mubr.bf16.gmra.mxu0 %v534
    %v1597 = vpop.f32.mrf.mxu0
    %v1598 = vadd.f32 %v1537, %v1597
    %v1599 = vpop.f32.mrf.mxu0
    %v1600 = vpop.f32.mrf.mxu0
    %v1601 = vadd.f32 %v1537, %v1600
    %v1602 = vpop.f32.mrf.mxu0
    %1603 = vmatprep.mubr.bf16.mxu0 %v537
    %1604 = vmatmul.mubr.bf16.gmra.mxu0 %v536
    %v1605 = vpop.f32.mrf.mxu0
    %v1606 = vadd.f32 %v1537, %v1605
    %v1607 = vpop.f32.mrf.mxu0
    %v1608 = vpop.f32.mrf.mxu0
    %v1609 = vadd.f32 %v1537, %v1608
    %v1610 = vpop.f32.mrf.mxu0
    %1611 = vmatprep.mubr.bf16.mxu0 %v539
    %1612 = vmatmul.mubr.bf16.gmra.mxu0 %v538
    %v1613 = vpop.f32.mrf.mxu0
    %v1614 = vadd.f32 %v1537, %v1613
    %v1615 = vpop.f32.mrf.mxu0
    %v1616 = vpop.f32.mrf.mxu0
    %v1617 = vadd.f32 %v1537, %v1616
    %v1618 = vpop.f32.mrf.mxu0
    %1619 = vmatprep.mubr.bf16.mxu0 %v541
    %1620 = vmatmul.mubr.bf16.gmra.mxu0 %v540
    %v1621 = vpop.f32.mrf.mxu0
    %v1622 = vadd.f32 %v1537, %v1621
    %v1623 = vpop.f32.mrf.mxu0
    %v1624 = vpop.f32.mrf.mxu0
    %v1625 = vadd.f32 %v1537, %v1624
    %v1626 = vpop.f32.mrf.mxu0
    %1627 = vmatprep.mubr.bf16.mxu0 %v543
    %1628 = vmatmul.mubr.bf16.gmra.mxu0 %v542
    %v1629 = vpop.f32.mrf.mxu0
    %v1630 = vadd.f32 %v1537, %v1629
    %v1631 = vpop.f32.mrf.mxu0
    %v1632 = vpop.f32.mrf.mxu0
    %v1633 = vadd.f32 %v1537, %v1632
    %v1634 = vpop.f32.mrf.mxu0
    %1635 = vmatprep.mubr.bf16.mxu0 %v545
    %1636 = vmatmul.mubr.bf16.gmra.mxu0 %v544
    %v1637 = vpop.f32.mrf.mxu0
    %v1638 = vadd.f32 %v1537, %v1637
    %v1639 = vpop.f32.mrf.mxu0
    %v1640 = vpop.f32.mrf.mxu0
    %v1641 = vadd.f32 %v1537, %v1640
    %v1642 = vpop.f32.mrf.mxu0
    %1643 = vmatprep.mubr.bf16.mxu0 %v547
    %1644 = vmatmul.mubr.bf16.gmra.mxu0 %v546
    %v1645 = vpop.f32.mrf.mxu0
    %v1646 = vadd.f32 %v1537, %v1645
    %v1647 = vpop.f32.mrf.mxu0
    %v1648 = vpop.f32.mrf.mxu0
    %v1649 = vadd.f32 %v1537, %v1648
    %v1650 = vpop.f32.mrf.mxu0
    %1651 = vmatprep.mubr.bf16.mxu0 %v549
    %1652 = vmatmul.mubr.bf16.gmra.mxu0 %v548
    %v1653 = vpop.f32.mrf.mxu0
    %v1654 = vadd.f32 %v1537, %v1653
    %v1655 = vpop.f32.mrf.mxu0
    %v1656 = vpop.f32.mrf.mxu0
    %v1657 = vadd.f32 %v1537, %v1656
    %v1658 = vpop.f32.mrf.mxu0
    %1659 = vmatprep.mubr.bf16.mxu0 %v551
    %1660 = vmatmul.mubr.bf16.gmra.mxu0 %v550
    %v1661 = vpop.f32.mrf.mxu0
    %v1662 = vadd.f32 %v1537, %v1661
    %v1663 = vpop.f32.mrf.mxu0
    %v1664 = vpop.f32.mrf.mxu0
    %v1665 = vadd.f32 %v1537, %v1664
    %v1666 = vpop.f32.mrf.mxu0
    %1667 = vmatprep.mubr.bf16.mxu0 %v553
    %1668 = vmatmul.mubr.bf16.gmra.mxu0 %v552
    %v1669 = vpop.f32.mrf.mxu0
    %v1670 = vadd.f32 %v1537, %v1669
    %v1671 = vpop.f32.mrf.mxu0
    %v1672 = vpop.f32.mrf.mxu0
    %v1673 = vadd.f32 %v1537, %v1672
    %v1674 = vpop.f32.mrf.mxu0
    %1675 = vmatprep.mubr.bf16.mxu0 %v555
    %1676 = vmatmul.mubr.bf16.gmra.mxu0 %v554
    %v1677 = vpop.f32.mrf.mxu0
    %v1678 = vadd.f32 %v1537, %v1677
    %v1679 = vpop.f32.mrf.mxu0
    %v1680 = vpop.f32.mrf.mxu0
    %v1681 = vadd.f32 %v1537, %v1680
    %v1682 = vpop.f32.mrf.mxu0
    %1683 = vmatprep.mubr.bf16.mxu0 %v557
    %1684 = vmatmul.mubr.bf16.gmra.mxu0 %v556
    %v1685 = vpop.f32.mrf.mxu0
    %v1686 = vadd.f32 %v1537, %v1685
    %v1687 = vpop.f32.mrf.mxu0
    %v1688 = vpop.f32.mrf.mxu0
    %v1689 = vadd.f32 %v1537, %v1688
    %v1690 = vpop.f32.mrf.mxu0
    %1691 = vmatprep.mubr.bf16.mxu0 %v559
    %1692 = vmatmul.mubr.bf16.gmra.mxu0 %v558
    %v1693 = vpop.f32.mrf.mxu0
    %v1694 = vadd.f32 %v1537, %v1693
    %v1695 = vpop.f32.mrf.mxu0
    %v1696 = vpop.f32.mrf.mxu0
    %v1697 = vadd.f32 %v1537, %v1696
    %v1698 = vpop.f32.mrf.mxu0
    %1699 = vdwg.mxu0
    %v1700 = vmax.f32 %v1574, 0.0
    %v1701 = vmax.f32 %v1577, 0.0
    %v1702 = vmax.f32 %v1582, 0.0
    %v1703 = vmax.f32 %v1585, 0.0
    %v1704 = vmax.f32 %v1590, 0.0
    %v1705 = vmax.f32 %v1593, 0.0
    %v1706 = vmax.f32 %v1598, 0.0
    %v1707 = vmax.f32 %v1601, 0.0
    %v1708 = vmax.f32 %v1606, 0.0
    %v1709 = vmax.f32 %v1609, 0.0
    %v1710 = vmax.f32 %v1614, 0.0
    %v1711 = vmax.f32 %v1617, 0.0
    %v1712 = vmax.f32 %v1622, 0.0
    %v1713 = vmax.f32 %v1625, 0.0
    %v1714 = vmax.f32 %v1630, 0.0
    %v1715 = vmax.f32 %v1633, 0.0
    %v1716 = vmax.f32 %v1638, 0.0
    %v1717 = vmax.f32 %v1641, 0.0
    %v1718 = vmax.f32 %v1646, 0.0
    %v1719 = vmax.f32 %v1649, 0.0
    %v1720 = vmax.f32 %v1654, 0.0
    %v1721 = vmax.f32 %v1657, 0.0
    %v1722 = vmax.f32 %v1662, 0.0
    %v1723 = vmax.f32 %v1665, 0.0
    %v1724 = vmax.f32 %v1670, 0.0
    %v1725 = vmax.f32 %v1673, 0.0
    %v1726 = vmax.f32 %v1678, 0.0
    %v1727 = vmax.f32 %v1681, 0.0
    %v1728 = vmax.f32 %v1686, 0.0
    %v1729 = vmax.f32 %v1689, 0.0
    %v1730 = vmax.f32 %v1694, 0.0
    %v1731 = vmax.f32 %v1697, 0.0
    %v1732 = vpack.c.bf16 %v1701, %v1700
    %v1733 = vpack.c.bf16 %v1703, %v1702
    %v1734 = vpack.c.bf16 %v1705, %v1704
    %v1735 = vpack.c.bf16 %v1707, %v1706
    %v1736 = vpack.c.bf16 %v1709, %v1708
    %v1737 = vpack.c.bf16 %v1711, %v1710
    %v1738 = vpack.c.bf16 %v1713, %v1712
    %v1739 = vpack.c.bf16 %v1715, %v1714
    %v1740 = vpack.c.bf16 %v1717, %v1716
    %v1741 = vpack.c.bf16 %v1719, %v1718
    %v1742 = vpack.c.bf16 %v1721, %v1720
    %v1743 = vpack.c.bf16 %v1723, %v1722
    %v1744 = vpack.c.bf16 %v1725, %v1724
    %v1745 = vpack.c.bf16 %v1727, %v1726
    %v1746 = vpack.c.bf16 %v1729, %v1728
    %v1747 = vpack.c.bf16 %v1731, %v1730
    %v1748 = vunpack.c.l.bf16 %v1732
    %v1749 = vunpack.c.h.bf16 %v1732
    %v1750 = vunpack.c.l.bf16 %v1733
    %v1751 = vunpack.c.h.bf16 %v1733
    %v1752 = vunpack.c.l.bf16 %v1734
    %v1753 = vunpack.c.h.bf16 %v1734
    %v1754 = vunpack.c.l.bf16 %v1735
    %v1755 = vunpack.c.h.bf16 %v1735
    %v1756 = vunpack.c.l.bf16 %v1736
    %v1757 = vunpack.c.h.bf16 %v1736
    %v1758 = vunpack.c.l.bf16 %v1737
    %v1759 = vunpack.c.h.bf16 %v1737
    %v1760 = vunpack.c.l.bf16 %v1738
    %v1761 = vunpack.c.h.bf16 %v1738
    %v1762 = vunpack.c.l.bf16 %v1739
    %v1763 = vunpack.c.h.bf16 %v1739
    %v1764 = vunpack.c.l.bf16 %v1740
    %v1765 = vunpack.c.h.bf16 %v1740
    %v1766 = vunpack.c.l.bf16 %v1741
    %v1767 = vunpack.c.h.bf16 %v1741
    %v1768 = vunpack.c.l.bf16 %v1742
    %v1769 = vunpack.c.h.bf16 %v1742
    %v1770 = vunpack.c.l.bf16 %v1743
    %v1771 = vunpack.c.h.bf16 %v1743
    %v1772 = vunpack.c.l.bf16 %v1744
    %v1773 = vunpack.c.h.bf16 %v1744
    %v1774 = vunpack.c.l.bf16 %v1745
    %v1775 = vunpack.c.h.bf16 %v1745
    %v1776 = vunpack.c.l.bf16 %v1746
    %v1777 = vunpack.c.h.bf16 %v1746
    %v1778 = vunpack.c.l.bf16 %v1747
    %v1779 = vunpack.c.h.bf16 %v1747
    %v1780 = vld [vmem:[%s2] sm:$0xff]
    %v1782 = vcombine.high %v1780, %v1780
    %1784 = vmatprep.subr.mxu0 0.0
    %1785 = vmatpush1.msra.mxu0 %v1763
    %1786 = vmatprep.subr.mxu0 0.0
    %1787 = vmatpush1.msra.mxu0 %v1762
    %1788 = vmatprep.subr.mxu0 0.0
    %1789 = vmatpush1.msra.mxu0 %v1761
    %1790 = vmatprep.subr.mxu0 0.0
    %1791 = vmatpush1.msra.mxu0 %v1760
    %1792 = vmatprep.subr.mxu0 0.0
    %1793 = vmatpush1.msra.mxu0 %v1759
    %1794 = vmatprep.subr.mxu0 0.0
    %1795 = vmatpush1.msra.mxu0 %v1758
    %1796 = vmatprep.subr.mxu0 0.0
    %1797 = vmatpush1.msra.mxu0 %v1757
    %1798 = vmatprep.subr.mxu0 0.0
    %1799 = vmatpush1.msra.mxu0 %v1756
    %1800 = vmatprep.subr.mxu0 0.0
    %1801 = vmatpush1.msra.mxu0 %v1755
    %1802 = vmatprep.subr.mxu0 0.0
    %1803 = vmatpush1.msra.mxu0 %v1754
    %1804 = vmatprep.subr.mxu0 0.0
    %1805 = vmatpush1.msra.mxu0 %v1753
    %1806 = vmatprep.subr.mxu0 0.0
    %1807 = vmatpush1.msra.mxu0 %v1752
    %1808 = vmatprep.subr.mxu0 0.0
    %1809 = vmatpush1.msra.mxu0 %v1751
    %1810 = vmatprep.subr.mxu0 0.0
    %1811 = vmatpush1.msra.mxu0 %v1750
    %1812 = vmatprep.subr.mxu0 0.0
    %1813 = vmatpush1.msra.mxu0 %v1749
    %1814 = vmatprep.subr.mxu0 0.0
    %1815 = vmatpush1.msra.mxu0 %v1748
    %1816 = vmatprep.subr.mxu0 0.0
    %1817 = vmatpush2.msra.mxu0 %v1779
    %1818 = vmatprep.subr.mxu0 0.0
    %1819 = vmatpush2.msra.mxu0 %v1778
    %1820 = vmatprep.subr.mxu0 0.0
    %1821 = vmatpush2.msra.mxu0 %v1777
    %1822 = vmatprep.subr.mxu0 0.0
    %1823 = vmatpush2.msra.mxu0 %v1776
    %1824 = vmatprep.subr.mxu0 0.0
    %1825 = vmatpush2.msra.mxu0 %v1775
    %1826 = vmatprep.subr.mxu0 0.0
    %1827 = vmatpush2.msra.mxu0 %v1774
    %1828 = vmatprep.subr.mxu0 0.0
    %1829 = vmatpush2.msra.mxu0 %v1773
    %1830 = vmatprep.subr.mxu0 0.0
    %1831 = vmatpush2.msra.mxu0 %v1772
    %1832 = vmatprep.subr.mxu0 0.0
    %1833 = vmatpush2.msra.mxu0 %v1771
    %1834 = vmatprep.subr.mxu0 0.0
    %1835 = vmatpush2.msra.mxu0 %v1770
    %1836 = vmatprep.subr.mxu0 0.0
    %1837 = vmatpush2.msra.mxu0 %v1769
    %1838 = vmatprep.subr.mxu0 0.0
    %1839 = vmatpush2.msra.mxu0 %v1768
    %1840 = vmatprep.subr.mxu0 0.0
    %1841 = vmatpush2.msra.mxu0 %v1767
    %1842 = vmatprep.subr.mxu0 0.0
    %1843 = vmatpush2.msra.mxu0 %v1766
    %1844 = vmatprep.subr.mxu0 0.0
    %1845 = vmatpush2.msra.mxu0 %v1765
    %1846 = vmatprep.subr.mxu0 0.0
    %1847 = vmatpush2.msra.mxu0 %v1764
    %1848 = vmatprep.mubr.f32.mxu0 %v1782
    %1849 = vmatmul.mubr.f32.gmra.mxu0 %v1780
    %v1850 = vpop.f32.mrf.mxu0
    %v1851 = vadd.f32 0.0, %v1850
    %v1852 = vpop.f32.mrf.mxu0
    %1853 = vdwg.mxu0
    %v1854 = vld [vmem:[%s3] sm:$0xff]
    %v1855 = vld [vmem:[%s3 + $0x8] sm:$0xff]
    %v1856 = vld [vmem:[%s3 + $0x10] sm:$0xff]
    %v1857 = vld [vmem:[%s3 + $0x18] sm:$0xff]
    %v1858 = vld [vmem:[%s3 + $0x20] sm:$0xff]
    %v1859 = vld [vmem:[%s3 + $0x28] sm:$0xff]
    %v1860 = vld [vmem:[%s3 + $0x30] sm:$0xff]
    %v1861 = vld [vmem:[%s3 + $0x38] sm:$0xff]
    %v1862 = vld [vmem:[%s3 + $0x40] sm:$0xff]
    %v1863 = vld [vmem:[%s3 + $0x48] sm:$0xff]
    %v1864 = vld [vmem:[%s3 + $0x50] sm:$0xff]
    %v1865 = vld [vmem:[%s3 + $0x58] sm:$0xff]
    %v1866 = vld [vmem:[%s3 + $0x60] sm:$0xff]
    %v1867 = vld [vmem:[%s3 + $0x68] sm:$0xff]
    %v1868 = vld [vmem:[%s3 + $0x70] sm:$0xff]
    %v1869 = vld [vmem:[%s3 + $0x78] sm:$0xff]
    %v1870 = vld [vmem:[%s3 + $0x80] sm:$0xff]
    %v1871 = vld [vmem:[%s3 + $0x88] sm:$0xff]
    %v1872 = vld [vmem:[%s3 + $0x90] sm:$0xff]
    %v1873 = vld [vmem:[%s3 + $0x98] sm:$0xff]
    %v1874 = vld [vmem:[%s3 + $0xa0] sm:$0xff]
    %v1875 = vld [vmem:[%s3 + $0xa8] sm:$0xff]
    %v1876 = vld [vmem:[%s3 + $0xb0] sm:$0xff]
    %v1877 = vld [vmem:[%s3 + $0xb8] sm:$0xff]
    %v1878 = vld [vmem:[%s3 + $0xc0] sm:$0xff]
    %v1879 = vld [vmem:[%s3 + $0xc8] sm:$0xff]
    %v1880 = vld [vmem:[%s3 + $0xd0] sm:$0xff]
    %v1881 = vld [vmem:[%s3 + $0xd8] sm:$0xff]
    %v1882 = vld [vmem:[%s3 + $0xe0] sm:$0xff]
    %v1883 = vld [vmem:[%s3 + $0xe8] sm:$0xff]
    %v1884 = vld [vmem:[%s3 + $0xf0] sm:$0xff]
    %v1885 = vld [vmem:[%s3 + $0xf8] sm:$0xff]
    %1887 = vset.pattern.permute.xlu0 0
    %1888 = vperm.xlu0 %1887, %v1854
    %v1889 = vpop.permute.xlu0 %1888
    %1892 = vset.pattern.permute.xlu0 0
    %1893 = vperm.xlu0 %1892, %v1855
    %v1894 = vpop.permute.xlu0 %1893
    %1897 = vset.pattern.permute.xlu0 0
    %1898 = vperm.xlu0 %1897, %v1856
    %v1899 = vpop.permute.xlu0 %1898
    %1902 = vset.pattern.permute.xlu0 0
    %1903 = vperm.xlu0 %1902, %v1857
    %v1904 = vpop.permute.xlu0 %1903
    %1907 = vset.pattern.permute.xlu0 0
    %1908 = vperm.xlu0 %1907, %v1858
    %v1909 = vpop.permute.xlu0 %1908
    %1912 = vset.pattern.permute.xlu0 0
    %1913 = vperm.xlu0 %1912, %v1859
    %v1914 = vpop.permute.xlu0 %1913
    %1917 = vset.pattern.permute.xlu0 0
    %1918 = vperm.xlu0 %1917, %v1860
    %v1919 = vpop.permute.xlu0 %1918
    %1922 = vset.pattern.permute.xlu0 0
    %1923 = vperm.xlu0 %1922, %v1861
    %v1924 = vpop.permute.xlu0 %1923
    %1927 = vset.pattern.permute.xlu0 0
    %1928 = vperm.xlu0 %1927, %v1862
    %v1929 = vpop.permute.xlu0 %1928
    %1932 = vset.pattern.permute.xlu0 0
    %1933 = vperm.xlu0 %1932, %v1863
    %v1934 = vpop.permute.xlu0 %1933
    %1937 = vset.pattern.permute.xlu0 0
    %1938 = vperm.xlu0 %1937, %v1864
    %v1939 = vpop.permute.xlu0 %1938
    %1942 = vset.pattern.permute.xlu0 0
    %1943 = vperm.xlu0 %1942, %v1865
    %v1944 = vpop.permute.xlu0 %1943
    %1947 = vset.pattern.permute.xlu0 0
    %1948 = vperm.xlu0 %1947, %v1866
    %v1949 = vpop.permute.xlu0 %1948
    %1952 = vset.pattern.permute.xlu0 0
    %1953 = vperm.xlu0 %1952, %v1867
    %v1954 = vpop.permute.xlu0 %1953
    %1957 = vset.pattern.permute.xlu0 0
    %1958 = vperm.xlu0 %1957, %v1868
    %v1959 = vpop.permute.xlu0 %1958
    %1962 = vset.pattern.permute.xlu0 0
    %1963 = vperm.xlu0 %1962, %v1869
    %v1964 = vpop.permute.xlu0 %1963
    %1967 = vset.pattern.permute.xlu0 0
    %1968 = vperm.xlu0 %1967, %v1870
    %v1969 = vpop.permute.xlu0 %1968
    %1972 = vset.pattern.permute.xlu0 0
    %1973 = vperm.xlu0 %1972, %v1871
    %v1974 = vpop.permute.xlu0 %1973
    %1977 = vset.pattern.permute.xlu0 0
    %1978 = vperm.xlu0 %1977, %v1872
    %v1979 = vpop.permute.xlu0 %1978
    %1982 = vset.pattern.permute.xlu0 0
    %1983 = vperm.xlu0 %1982, %v1873
    %v1984 = vpop.permute.xlu0 %1983
    %1987 = vset.pattern.permute.xlu0 0
    %1988 = vperm.xlu0 %1987, %v1874
    %v1989 = vpop.permute.xlu0 %1988
    %1992 = vset.pattern.permute.xlu0 0
    %1993 = vperm.xlu0 %1992, %v1875
    %v1994 = vpop.permute.xlu0 %1993
    %1997 = vset.pattern.permute.xlu0 0
    %1998 = vperm.xlu0 %1997, %v1876
    %v1999 = vpop.permute.xlu0 %1998
    %2002 = vset.pattern.permute.xlu0 0
    %2003 = vperm.xlu0 %2002, %v1877
    %v2004 = vpop.permute.xlu0 %2003
    %2007 = vset.pattern.permute.xlu0 0
    %2008 = vperm.xlu0 %2007, %v1878
    %v2009 = vpop.permute.xlu0 %2008
    %2012 = vset.pattern.permute.xlu0 0
    %2013 = vperm.xlu0 %2012, %v1879
    %v2014 = vpop.permute.xlu0 %2013
    %2017 = vset.pattern.permute.xlu0 0
    %2018 = vperm.xlu0 %2017, %v1880
    %v2019 = vpop.permute.xlu0 %2018
    %2022 = vset.pattern.permute.xlu0 0
    %2023 = vperm.xlu0 %2022, %v1881
    %v2024 = vpop.permute.xlu0 %2023
    %2027 = vset.pattern.permute.xlu0 0
    %2028 = vperm.xlu0 %2027, %v1882
    %v2029 = vpop.permute.xlu0 %2028
    %2032 = vset.pattern.permute.xlu0 0
    %2033 = vperm.xlu0 %2032, %v1883
    %v2034 = vpop.permute.xlu0 %2033
    %2037 = vset.pattern.permute.xlu0 0
    %2038 = vperm.xlu0 %2037, %v1884
    %v2039 = vpop.permute.xlu0 %2038
    %2042 = vset.pattern.permute.xlu0 0
    %2043 = vperm.xlu0 %2042, %v1885
    %v2044 = vpop.permute.xlu0 %2043
    %v2046 = vmul.f32 %v1748, %v1889
    %v2047 = vmul.f32 %v1749, %v1894
    %v2048 = vmul.f32 %v1750, %v1899
    %v2049 = vmul.f32 %v1751, %v1904
    %v2050 = vmul.f32 %v1752, %v1909
    %v2051 = vmul.f32 %v1753, %v1914
    %v2052 = vmul.f32 %v1754, %v1919
    %v2053 = vmul.f32 %v1755, %v1924
    %v2054 = vmul.f32 %v1756, %v1929
    %v2055 = vmul.f32 %v1757, %v1934
    %v2056 = vmul.f32 %v1758, %v1939
    %v2057 = vmul.f32 %v1759, %v1944
    %v2058 = vmul.f32 %v1760, %v1949
    %v2059 = vmul.f32 %v1761, %v1954
    %v2060 = vmul.f32 %v1762, %v1959
    %v2061 = vmul.f32 %v1763, %v1964
    %v2062 = vmul.f32 %v1764, %v1969
    %v2063 = vmul.f32 %v1765, %v1974
    %v2064 = vmul.f32 %v1766, %v1979
    %v2065 = vmul.f32 %v1767, %v1984
    %v2066 = vmul.f32 %v1768, %v1989
    %v2067 = vmul.f32 %v1769, %v1994
    %v2068 = vmul.f32 %v1770, %v1999
    %v2069 = vmul.f32 %v1771, %v2004
    %v2070 = vmul.f32 %v1772, %v2009
    %v2071 = vmul.f32 %v1773, %v2014
    %v2072 = vmul.f32 %v1774, %v2019
    %v2073 = vmul.f32 %v1775, %v2024
    %v2074 = vmul.f32 %v1776, %v2029
    %v2075 = vmul.f32 %v1777, %v2034
    %v2076 = vmul.f32 %v1778, %v2039
    %v2077 = vmul.f32 %v1779, %v2044
    %v2078 = vsel %vm833, %v2046, -inf
    %v2079 = vsel %vm833, %v2047, -inf
    %v2080 = vsel %vm833, %v2048, -inf
    %v2081 = vsel %vm833, %v2049, -inf
    %v2082 = vsel %vm833, %v2050, -inf
    %v2083 = vmax.f32 %v2078, %v2082
    %v2084 = vsel %vm833, %v2051, -inf
    %v2085 = vmax.f32 %v2079, %v2084
    %v2086 = vsel %vm833, %v2052, -inf
    %v2087 = vmax.f32 %v2080, %v2086
    %v2088 = vsel %vm833, %v2053, -inf
    %v2089 = vmax.f32 %v2081, %v2088
    %v2090 = vsel %vm833, %v2054, -inf
    %v2091 = vmax.f32 %v2083, %v2090
    %v2092 = vsel %vm833, %v2055, -inf
    %v2093 = vmax.f32 %v2085, %v2092
    %v2094 = vsel %vm833, %v2056, -inf
    %v2095 = vmax.f32 %v2087, %v2094
    %v2096 = vsel %vm833, %v2057, -inf
    %v2097 = vmax.f32 %v2089, %v2096
    %v2098 = vsel %vm833, %v2058, -inf
    %v2099 = vmax.f32 %v2091, %v2098
    %v2100 = vsel %vm833, %v2059, -inf
    %v2101 = vmax.f32 %v2093, %v2100
    %v2102 = vsel %vm833, %v2060, -inf
    %v2103 = vmax.f32 %v2095, %v2102
    %v2104 = vsel %vm833, %v2061, -inf
    %v2105 = vmax.f32 %v2097, %v2104
    %v2106 = vsel %vm833, %v2062, -inf
    %v2107 = vmax.f32 %v2099, %v2106
    %v2108 = vsel %vm833, %v2063, -inf
    %v2109 = vmax.f32 %v2101, %v2108
    %v2110 = vsel %vm833, %v2064, -inf
    %v2111 = vmax.f32 %v2103, %v2110
    %v2112 = vsel %vm833, %v2065, -inf
    %v2113 = vmax.f32 %v2105, %v2112
    %v2114 = vsel %vm833, %v2066, -inf
    %v2115 = vmax.f32 %v2107, %v2114
    %v2116 = vsel %vm833, %v2067, -inf
    %v2117 = vmax.f32 %v2109, %v2116
    %v2118 = vsel %vm833, %v2068, -inf
    %v2119 = vmax.f32 %v2111, %v2118
    %v2120 = vsel %vm833, %v2069, -inf
    %v2121 = vmax.f32 %v2113, %v2120
    %v2122 = vsel %vm833, %v2070, -inf
    %v2123 = vmax.f32 %v2115, %v2122
    %v2124 = vsel %vm833, %v2071, -inf
    %v2125 = vmax.f32 %v2117, %v2124
    %v2126 = vsel %vm833, %v2072, -inf
    %v2127 = vmax.f32 %v2119, %v2126
    %v2128 = vsel %vm833, %v2073, -inf
    %v2129 = vmax.f32 %v2121, %v2128
    %v2130 = vsel %vm833, %v2074, -inf
    %v2131 = vmax.f32 %v2123, %v2130
    %v2132 = vsel %vm833, %v2075, -inf
    %v2133 = vmax.f32 %v2125, %v2132
    %v2134 = vsel %vm833, %v2076, -inf
    %v2135 = vmax.f32 %v2127, %v2134
    %v2136 = vsel %vm833, %v2077, -inf
    %v2137 = vmax.f32 %v2129, %v2136
    %v2138 = vmax.f32 %v2131, %v2133
    %v2139 = vmax.f32 %v2135, %v2137
    %v2140 = vmax.f32 %v2138, %v2139
    %v2141 = vrot.slane %v2140, 4
    %v2142 = vmax.f32 %v2140, %v2141
    %v2143 = vrot.slane %v2142, 2
    %v2144 = vmax.f32 %v2142, %v2143
    %v2145 = vrot.slane %v2144, 1
    %v2146 = vmax.f32 %v2144, %v2145
    %2147 = vset.pattern.permute.xlu0 1
    %2148 = vperm.xlu0 %2147, %v1854
    %v2149 = vpop.permute.xlu0 %2148
    %2151 = vset.pattern.permute.xlu0 1
    %2152 = vperm.xlu0 %2151, %v1855
    %v2153 = vpop.permute.xlu0 %2152
    %2155 = vset.pattern.permute.xlu0 1
    %2156 = vperm.xlu0 %2155, %v1856
    %v2157 = vpop.permute.xlu0 %2156
    %2159 = vset.pattern.permute.xlu0 1
    %2160 = vperm.xlu0 %2159, %v1857
    %v2161 = vpop.permute.xlu0 %2160
    %2163 = vset.pattern.permute.xlu0 1
    %2164 = vperm.xlu0 %2163, %v1858
    %v2165 = vpop.permute.xlu0 %2164
    %2167 = vset.pattern.permute.xlu0 1
    %2168 = vperm.xlu0 %2167, %v1859
    %v2169 = vpop.permute.xlu0 %2168
    %2171 = vset.pattern.permute.xlu0 1
    %2172 = vperm.xlu0 %2171, %v1860
    %v2173 = vpop.permute.xlu0 %2172
    %2175 = vset.pattern.permute.xlu0 1
    %2176 = vperm.xlu0 %2175, %v1861
    %v2177 = vpop.permute.xlu0 %2176
    %2179 = vset.pattern.permute.xlu0 1
    %2180 = vperm.xlu0 %2179, %v1862
    %v2181 = vpop.permute.xlu0 %2180
    %2183 = vset.pattern.permute.xlu0 1
    %2184 = vperm.xlu0 %2183, %v1863
    %v2185 = vpop.permute.xlu0 %2184
    %2187 = vset.pattern.permute.xlu0 1
    %2188 = vperm.xlu0 %2187, %v1864
    %v2189 = vpop.permute.xlu0 %2188
    %2191 = vset.pattern.permute.xlu0 1
    %2192 = vperm.xlu0 %2191, %v1865
    %v2193 = vpop.permute.xlu0 %2192
    %2195 = vset.pattern.permute.xlu0 1
    %2196 = vperm.xlu0 %2195, %v1866
    %v2197 = vpop.permute.xlu0 %2196
    %2199 = vset.pattern.permute.xlu0 1
    %2200 = vperm.xlu0 %2199, %v1867
    %v2201 = vpop.permute.xlu0 %2200
    %2203 = vset.pattern.permute.xlu0 1
    %2204 = vperm.xlu0 %2203, %v1868
    %v2205 = vpop.permute.xlu0 %2204
    %2207 = vset.pattern.permute.xlu0 1
    %2208 = vperm.xlu0 %2207, %v1869
    %v2209 = vpop.permute.xlu0 %2208
    %2211 = vset.pattern.permute.xlu0 1
    %2212 = vperm.xlu0 %2211, %v1870
    %v2213 = vpop.permute.xlu0 %2212
    %2215 = vset.pattern.permute.xlu0 1
    %2216 = vperm.xlu0 %2215, %v1871
    %v2217 = vpop.permute.xlu0 %2216
    %2219 = vset.pattern.permute.xlu0 1
    %2220 = vperm.xlu0 %2219, %v1872
    %v2221 = vpop.permute.xlu0 %2220
    %2223 = vset.pattern.permute.xlu0 1
    %2224 = vperm.xlu0 %2223, %v1873
    %v2225 = vpop.permute.xlu0 %2224
    %2227 = vset.pattern.permute.xlu0 1
    %2228 = vperm.xlu0 %2227, %v1874
    %v2229 = vpop.permute.xlu0 %2228
    %2231 = vset.pattern.permute.xlu0 1
    %2232 = vperm.xlu0 %2231, %v1875
    %v2233 = vpop.permute.xlu0 %2232
    %2235 = vset.pattern.permute.xlu0 1
    %2236 = vperm.xlu0 %2235, %v1876
    %v2237 = vpop.permute.xlu0 %2236
    %2239 = vset.pattern.permute.xlu0 1
    %2240 = vperm.xlu0 %2239, %v1877
    %v2241 = vpop.permute.xlu0 %2240
    %2243 = vset.pattern.permute.xlu0 1
    %2244 = vperm.xlu0 %2243, %v1878
    %v2245 = vpop.permute.xlu0 %2244
    %2247 = vset.pattern.permute.xlu0 1
    %2248 = vperm.xlu0 %2247, %v1879
    %v2249 = vpop.permute.xlu0 %2248
    %2251 = vset.pattern.permute.xlu0 1
    %2252 = vperm.xlu0 %2251, %v1880
    %v2253 = vpop.permute.xlu0 %2252
    %2255 = vset.pattern.permute.xlu0 1
    %2256 = vperm.xlu0 %2255, %v1881
    %v2257 = vpop.permute.xlu0 %2256
    %2259 = vset.pattern.permute.xlu0 1
    %2260 = vperm.xlu0 %2259, %v1882
    %v2261 = vpop.permute.xlu0 %2260
    %2263 = vset.pattern.permute.xlu0 1
    %2264 = vperm.xlu0 %2263, %v1883
    %v2265 = vpop.permute.xlu0 %2264
    %2267 = vset.pattern.permute.xlu0 1
    %2268 = vperm.xlu0 %2267, %v1884
    %v2269 = vpop.permute.xlu0 %2268
    %2271 = vset.pattern.permute.xlu0 1
    %2272 = vperm.xlu0 %2271, %v1885
    %v2273 = vpop.permute.xlu0 %2272
    %v2275 = vmul.f32 %v1748, %v2149
    %v2276 = vmul.f32 %v1749, %v2153
    %v2277 = vmul.f32 %v1750, %v2157
    %v2278 = vmul.f32 %v1751, %v2161
    %v2279 = vmul.f32 %v1752, %v2165
    %v2280 = vmul.f32 %v1753, %v2169
    %v2281 = vmul.f32 %v1754, %v2173
    %v2282 = vmul.f32 %v1755, %v2177
    %v2283 = vmul.f32 %v1756, %v2181
    %v2284 = vmul.f32 %v1757, %v2185
    %v2285 = vmul.f32 %v1758, %v2189
    %v2286 = vmul.f32 %v1759, %v2193
    %v2287 = vmul.f32 %v1760, %v2197
    %v2288 = vmul.f32 %v1761, %v2201
    %v2289 = vmul.f32 %v1762, %v2205
    %v2290 = vmul.f32 %v1763, %v2209
    %v2291 = vmul.f32 %v1764, %v2213
    %v2292 = vmul.f32 %v1765, %v2217
    %v2293 = vmul.f32 %v1766, %v2221
    %v2294 = vmul.f32 %v1767, %v2225
    %v2295 = vmul.f32 %v1768, %v2229
    %v2296 = vmul.f32 %v1769, %v2233
    %v2297 = vmul.f32 %v1770, %v2237
    %v2298 = vmul.f32 %v1771, %v2241
    %v2299 = vmul.f32 %v1772, %v2245
    %v2300 = vmul.f32 %v1773, %v2249
    %v2301 = vmul.f32 %v1774, %v2253
    %v2302 = vmul.f32 %v1775, %v2257
    %v2303 = vmul.f32 %v1776, %v2261
    %v2304 = vmul.f32 %v1777, %v2265
    %v2305 = vmul.f32 %v1778, %v2269
    %v2306 = vmul.f32 %v1779, %v2273
    %v2307 = vsel %vm833, %v2275, -inf
    %v2308 = vsel %vm833, %v2276, -inf
    %v2309 = vsel %vm833, %v2277, -inf
    %v2310 = vsel %vm833, %v2278, -inf
    %v2311 = vsel %vm833, %v2279, -inf
    %v2312 = vmax.f32 %v2307, %v2311
    %v2313 = vsel %vm833, %v2280, -inf
    %v2314 = vmax.f32 %v2308, %v2313
    %v2315 = vsel %vm833, %v2281, -inf
    %v2316 = vmax.f32 %v2309, %v2315
    %v2317 = vsel %vm833, %v2282, -inf
    %v2318 = vmax.f32 %v2310, %v2317
    %v2319 = vsel %vm833, %v2283, -inf
    %v2320 = vmax.f32 %v2312, %v2319
    %v2321 = vsel %vm833, %v2284, -inf
    %v2322 = vmax.f32 %v2314, %v2321
    %v2323 = vsel %vm833, %v2285, -inf
    %v2324 = vmax.f32 %v2316, %v2323
    %v2325 = vsel %vm833, %v2286, -inf
    %v2326 = vmax.f32 %v2318, %v2325
    %v2327 = vsel %vm833, %v2287, -inf
    %v2328 = vmax.f32 %v2320, %v2327
    %v2329 = vsel %vm833, %v2288, -inf
    %v2330 = vmax.f32 %v2322, %v2329
    %v2331 = vsel %vm833, %v2289, -inf
    %v2332 = vmax.f32 %v2324, %v2331
    %v2333 = vsel %vm833, %v2290, -inf
    %v2334 = vmax.f32 %v2326, %v2333
    %v2335 = vsel %vm833, %v2291, -inf
    %v2336 = vmax.f32 %v2328, %v2335
    %v2337 = vsel %vm833, %v2292, -inf
    %v2338 = vmax.f32 %v2330, %v2337
    %v2339 = vsel %vm833, %v2293, -inf
    %v2340 = vmax.f32 %v2332, %v2339
    %v2341 = vsel %vm833, %v2294, -inf
    %v2342 = vmax.f32 %v2334, %v2341
    %v2343 = vsel %vm833, %v2295, -inf
    %v2344 = vmax.f32 %v2336, %v2343
    %v2345 = vsel %vm833, %v2296, -inf
    %v2346 = vmax.f32 %v2338, %v2345
    %v2347 = vsel %vm833, %v2297, -inf
    %v2348 = vmax.f32 %v2340, %v2347
    %v2349 = vsel %vm833, %v2298, -inf
    %v2350 = vmax.f32 %v2342, %v2349
    %v2351 = vsel %vm833, %v2299, -inf
    %v2352 = vmax.f32 %v2344, %v2351
    %v2353 = vsel %vm833, %v2300, -inf
    %v2354 = vmax.f32 %v2346, %v2353
    %v2355 = vsel %vm833, %v2301, -inf
    %v2356 = vmax.f32 %v2348, %v2355
    %v2357 = vsel %vm833, %v2302, -inf
    %v2358 = vmax.f32 %v2350, %v2357
    %v2359 = vsel %vm833, %v2303, -inf
    %v2360 = vmax.f32 %v2352, %v2359
    %v2361 = vsel %vm833, %v2304, -inf
    %v2362 = vmax.f32 %v2354, %v2361
    %v2363 = vsel %vm833, %v2305, -inf
    %v2364 = vmax.f32 %v2356, %v2363
    %v2365 = vsel %vm833, %v2306, -inf
    %v2366 = vmax.f32 %v2358, %v2365
    %v2367 = vmax.f32 %v2360, %v2362
    %v2368 = vmax.f32 %v2364, %v2366
    %v2369 = vmax.f32 %v2367, %v2368
    %v2370 = vrot.slane %v2369, 4
    %v2371 = vmax.f32 %v2369, %v2370
    %v2372 = vrot.slane %v2371, 2
    %v2373 = vmax.f32 %v2371, %v2372
    %v2374 = vrot.slane %v2373, 1
    %v2375 = vmax.f32 %v2373, %v2374
    %2376 = vset.pattern.permute.xlu0 2
    %2377 = vperm.xlu0 %2376, %v1854
    %v2378 = vpop.permute.xlu0 %2377
    %2380 = vset.pattern.permute.xlu0 2
    %2381 = vperm.xlu0 %2380, %v1855
    %v2382 = vpop.permute.xlu0 %2381
    %2384 = vset.pattern.permute.xlu0 2
    %2385 = vperm.xlu0 %2384, %v1856
    %v2386 = vpop.permute.xlu0 %2385
    %2388 = vset.pattern.permute.xlu0 2
    %2389 = vperm.xlu0 %2388, %v1857
    %v2390 = vpop.permute.xlu0 %2389
    %2392 = vset.pattern.permute.xlu0 2
    %2393 = vperm.xlu0 %2392, %v1858
    %v2394 = vpop.permute.xlu0 %2393
    %2396 = vset.pattern.permute.xlu0 2
    %2397 = vperm.xlu0 %2396, %v1859
    %v2398 = vpop.permute.xlu0 %2397
    %2400 = vset.pattern.permute.xlu0 2
    %2401 = vperm.xlu0 %2400, %v1860
    %v2402 = vpop.permute.xlu0 %2401
    %2404 = vset.pattern.permute.xlu0 2
    %2405 = vperm.xlu0 %2404, %v1861
    %v2406 = vpop.permute.xlu0 %2405
    %2408 = vset.pattern.permute.xlu0 2
    %2409 = vperm.xlu0 %2408, %v1862
    %v2410 = vpop.permute.xlu0 %2409
    %2412 = vset.pattern.permute.xlu0 2
    %2413 = vperm.xlu0 %2412, %v1863
    %v2414 = vpop.permute.xlu0 %2413
    %2416 = vset.pattern.permute.xlu0 2
    %2417 = vperm.xlu0 %2416, %v1864
    %v2418 = vpop.permute.xlu0 %2417
    %2420 = vset.pattern.permute.xlu0 2
    %2421 = vperm.xlu0 %2420, %v1865
    %v2422 = vpop.permute.xlu0 %2421
    %2424 = vset.pattern.permute.xlu0 2
    %2425 = vperm.xlu0 %2424, %v1866
    %v2426 = vpop.permute.xlu0 %2425
    %2428 = vset.pattern.permute.xlu0 2
    %2429 = vperm.xlu0 %2428, %v1867
    %v2430 = vpop.permute.xlu0 %2429
    %2432 = vset.pattern.permute.xlu0 2
    %2433 = vperm.xlu0 %2432, %v1868
    %v2434 = vpop.permute.xlu0 %2433
    %2436 = vset.pattern.permute.xlu0 2
    %2437 = vperm.xlu0 %2436, %v1869
    %v2438 = vpop.permute.xlu0 %2437
    %2440 = vset.pattern.permute.xlu0 2
    %2441 = vperm.xlu0 %2440, %v1870
    %v2442 = vpop.permute.xlu0 %2441
    %2444 = vset.pattern.permute.xlu0 2
    %2445 = vperm.xlu0 %2444, %v1871
    %v2446 = vpop.permute.xlu0 %2445
    %2448 = vset.pattern.permute.xlu0 2
    %2449 = vperm.xlu0 %2448, %v1872
    %v2450 = vpop.permute.xlu0 %2449
    %2452 = vset.pattern.permute.xlu0 2
    %2453 = vperm.xlu0 %2452, %v1873
    %v2454 = vpop.permute.xlu0 %2453
    %2456 = vset.pattern.permute.xlu0 2
    %2457 = vperm.xlu0 %2456, %v1874
    %v2458 = vpop.permute.xlu0 %2457
    %2460 = vset.pattern.permute.xlu0 2
    %2461 = vperm.xlu0 %2460, %v1875
    %v2462 = vpop.permute.xlu0 %2461
    %2464 = vset.pattern.permute.xlu0 2
    %2465 = vperm.xlu0 %2464, %v1876
    %v2466 = vpop.permute.xlu0 %2465
    %2468 = vset.pattern.permute.xlu0 2
    %2469 = vperm.xlu0 %2468, %v1877
    %v2470 = vpop.permute.xlu0 %2469
    %2472 = vset.pattern.permute.xlu0 2
    %2473 = vperm.xlu0 %2472, %v1878
    %v2474 = vpop.permute.xlu0 %2473
    %2476 = vset.pattern.permute.xlu0 2
    %2477 = vperm.xlu0 %2476, %v1879
    %v2478 = vpop.permute.xlu0 %2477
    %2480 = vset.pattern.permute.xlu0 2
    %2481 = vperm.xlu0 %2480, %v1880
    %v2482 = vpop.permute.xlu0 %2481
    %2484 = vset.pattern.permute.xlu0 2
    %2485 = vperm.xlu0 %2484, %v1881
    %v2486 = vpop.permute.xlu0 %2485
    %2488 = vset.pattern.permute.xlu0 2
    %2489 = vperm.xlu0 %2488, %v1882
    %v2490 = vpop.permute.xlu0 %2489
    %2492 = vset.pattern.permute.xlu0 2
    %2493 = vperm.xlu0 %2492, %v1883
    %v2494 = vpop.permute.xlu0 %2493
    %2496 = vset.pattern.permute.xlu0 2
    %2497 = vperm.xlu0 %2496, %v1884
    %v2498 = vpop.permute.xlu0 %2497
    %2500 = vset.pattern.permute.xlu0 2
    %2501 = vperm.xlu0 %2500, %v1885
    %v2502 = vpop.permute.xlu0 %2501
    %v2504 = vmul.f32 %v1748, %v2378
    %v2505 = vmul.f32 %v1749, %v2382
    %v2506 = vmul.f32 %v1750, %v2386
    %v2507 = vmul.f32 %v1751, %v2390
    %v2508 = vmul.f32 %v1752, %v2394
    %v2509 = vmul.f32 %v1753, %v2398
    %v2510 = vmul.f32 %v1754, %v2402
    %v2511 = vmul.f32 %v1755, %v2406
    %v2512 = vmul.f32 %v1756, %v2410
    %v2513 = vmul.f32 %v1757, %v2414
    %v2514 = vmul.f32 %v1758, %v2418
    %v2515 = vmul.f32 %v1759, %v2422
    %v2516 = vmul.f32 %v1760, %v2426
    %v2517 = vmul.f32 %v1761, %v2430
    %v2518 = vmul.f32 %v1762, %v2434
    %v2519 = vmul.f32 %v1763, %v2438
    %v2520 = vmul.f32 %v1764, %v2442
    %v2521 = vmul.f32 %v1765, %v2446
    %v2522 = vmul.f32 %v1766, %v2450
    %v2523 = vmul.f32 %v1767, %v2454
    %v2524 = vmul.f32 %v1768, %v2458
    %v2525 = vmul.f32 %v1769, %v2462
    %v2526 = vmul.f32 %v1770, %v2466
    %v2527 = vmul.f32 %v1771, %v2470
    %v2528 = vmul.f32 %v1772, %v2474
    %v2529 = vmul.f32 %v1773, %v2478
    %v2530 = vmul.f32 %v1774, %v2482
    %v2531 = vmul.f32 %v1775, %v2486
    %v2532 = vmul.f32 %v1776, %v2490
    %v2533 = vmul.f32 %v1777, %v2494
    %v2534 = vmul.f32 %v1778, %v2498
    %v2535 = vmul.f32 %v1779, %v2502
    %v2536 = vsel %vm833, %v2504, -inf
    %v2537 = vsel %vm833, %v2505, -inf
    %v2538 = vsel %vm833, %v2506, -inf
    %v2539 = vsel %vm833, %v2507, -inf
    %v2540 = vsel %vm833, %v2508, -inf
    %v2541 = vmax.f32 %v2536, %v2540
    %v2542 = vsel %vm833, %v2509, -inf
    %v2543 = vmax.f32 %v2537, %v2542
    %v2544 = vsel %vm833, %v2510, -inf
    %v2545 = vmax.f32 %v2538, %v2544
    %v2546 = vsel %vm833, %v2511, -inf
    %v2547 = vmax.f32 %v2539, %v2546
    %v2548 = vsel %vm833, %v2512, -inf
    %v2549 = vmax.f32 %v2541, %v2548
    %v2550 = vsel %vm833, %v2513, -inf
    %v2551 = vmax.f32 %v2543, %v2550
    %v2552 = vsel %vm833, %v2514, -inf
    %v2553 = vmax.f32 %v2545, %v2552
    %v2554 = vsel %vm833, %v2515, -inf
    %v2555 = vmax.f32 %v2547, %v2554
    %v2556 = vsel %vm833, %v2516, -inf
    %v2557 = vmax.f32 %v2549, %v2556
    %v2558 = vsel %vm833, %v2517, -inf
    %v2559 = vmax.f32 %v2551, %v2558
    %v2560 = vsel %vm833, %v2518, -inf
    %v2561 = vmax.f32 %v2553, %v2560
    %v2562 = vsel %vm833, %v2519, -inf
    %v2563 = vmax.f32 %v2555, %v2562
    %v2564 = vsel %vm833, %v2520, -inf
    %v2565 = vmax.f32 %v2557, %v2564
    %v2566 = vsel %vm833, %v2521, -inf
    %v2567 = vmax.f32 %v2559, %v2566
    %v2568 = vsel %vm833, %v2522, -inf
    %v2569 = vmax.f32 %v2561, %v2568
    %v2570 = vsel %vm833, %v2523, -inf
    %v2571 = vmax.f32 %v2563, %v2570
    %v2572 = vsel %vm833, %v2524, -inf
    %v2573 = vmax.f32 %v2565, %v2572
    %v2574 = vsel %vm833, %v2525, -inf
    %v2575 = vmax.f32 %v2567, %v2574
    %v2576 = vsel %vm833, %v2526, -inf
    %v2577 = vmax.f32 %v2569, %v2576
    %v2578 = vsel %vm833, %v2527, -inf
    %v2579 = vmax.f32 %v2571, %v2578
    %v2580 = vsel %vm833, %v2528, -inf
    %v2581 = vmax.f32 %v2573, %v2580
    %v2582 = vsel %vm833, %v2529, -inf
    %v2583 = vmax.f32 %v2575, %v2582
    %v2584 = vsel %vm833, %v2530, -inf
    %v2585 = vmax.f32 %v2577, %v2584
    %v2586 = vsel %vm833, %v2531, -inf
    %v2587 = vmax.f32 %v2579, %v2586
    %v2588 = vsel %vm833, %v2532, -inf
    %v2589 = vmax.f32 %v2581, %v2588
    %v2590 = vsel %vm833, %v2533, -inf
    %v2591 = vmax.f32 %v2583, %v2590
    %v2592 = vsel %vm833, %v2534, -inf
    %v2593 = vmax.f32 %v2585, %v2592
    %v2594 = vsel %vm833, %v2535, -inf
    %v2595 = vmax.f32 %v2587, %v2594
    %v2596 = vmax.f32 %v2589, %v2591
    %v2597 = vmax.f32 %v2593, %v2595
    %v2598 = vmax.f32 %v2596, %v2597
    %v2599 = vrot.slane %v2598, 4
    %v2600 = vmax.f32 %v2598, %v2599
    %v2601 = vrot.slane %v2600, 2
    %v2602 = vmax.f32 %v2600, %v2601
    %v2603 = vrot.slane %v2602, 1
    %v2604 = vmax.f32 %v2602, %v2603
    %2605 = vset.pattern.permute.xlu0 3
    %2606 = vperm.xlu0 %2605, %v1854
    %v2607 = vpop.permute.xlu0 %2606
    %2609 = vset.pattern.permute.xlu0 3
    %2610 = vperm.xlu0 %2609, %v1855
    %v2611 = vpop.permute.xlu0 %2610
    %2613 = vset.pattern.permute.xlu0 3
    %2614 = vperm.xlu0 %2613, %v1856
    %v2615 = vpop.permute.xlu0 %2614
    %2617 = vset.pattern.permute.xlu0 3
    %2618 = vperm.xlu0 %2617, %v1857
    %v2619 = vpop.permute.xlu0 %2618
    %2621 = vset.pattern.permute.xlu0 3
    %2622 = vperm.xlu0 %2621, %v1858
    %v2623 = vpop.permute.xlu0 %2622
    %2625 = vset.pattern.permute.xlu0 3
    %2626 = vperm.xlu0 %2625, %v1859
    %v2627 = vpop.permute.xlu0 %2626
    %2629 = vset.pattern.permute.xlu0 3
    %2630 = vperm.xlu0 %2629, %v1860
    %v2631 = vpop.permute.xlu0 %2630
    %2633 = vset.pattern.permute.xlu0 3
    %2634 = vperm.xlu0 %2633, %v1861
    %v2635 = vpop.permute.xlu0 %2634
    %2637 = vset.pattern.permute.xlu0 3
    %2638 = vperm.xlu0 %2637, %v1862
    %v2639 = vpop.permute.xlu0 %2638
    %2641 = vset.pattern.permute.xlu0 3
    %2642 = vperm.xlu0 %2641, %v1863
    %v2643 = vpop.permute.xlu0 %2642
    %2645 = vset.pattern.permute.xlu0 3
    %2646 = vperm.xlu0 %2645, %v1864
    %v2647 = vpop.permute.xlu0 %2646
    %2649 = vset.pattern.permute.xlu0 3
    %2650 = vperm.xlu0 %2649, %v1865
    %v2651 = vpop.permute.xlu0 %2650
    %2653 = vset.pattern.permute.xlu0 3
    %2654 = vperm.xlu0 %2653, %v1866
    %v2655 = vpop.permute.xlu0 %2654
    %2657 = vset.pattern.permute.xlu0 3
    %2658 = vperm.xlu0 %2657, %v1867
    %v2659 = vpop.permute.xlu0 %2658
    %2661 = vset.pattern.permute.xlu0 3
    %2662 = vperm.xlu0 %2661, %v1868
    %v2663 = vpop.permute.xlu0 %2662
    %2665 = vset.pattern.permute.xlu0 3
    %2666 = vperm.xlu0 %2665, %v1869
    %v2667 = vpop.permute.xlu0 %2666
    %2669 = vset.pattern.permute.xlu0 3
    %2670 = vperm.xlu0 %2669, %v1870
    %v2671 = vpop.permute.xlu0 %2670
    %2673 = vset.pattern.permute.xlu0 3
    %2674 = vperm.xlu0 %2673, %v1871
    %v2675 = vpop.permute.xlu0 %2674
    %2677 = vset.pattern.permute.xlu0 3
    %2678 = vperm.xlu0 %2677, %v1872
    %v2679 = vpop.permute.xlu0 %2678
    %2681 = vset.pattern.permute.xlu0 3
    %2682 = vperm.xlu0 %2681, %v1873
    %v2683 = vpop.permute.xlu0 %2682
    %2685 = vset.pattern.permute.xlu0 3
    %2686 = vperm.xlu0 %2685, %v1874
    %v2687 = vpop.permute.xlu0 %2686
    %2689 = vset.pattern.permute.xlu0 3
    %2690 = vperm.xlu0 %2689, %v1875
    %v2691 = vpop.permute.xlu0 %2690
    %2693 = vset.pattern.permute.xlu0 3
    %2694 = vperm.xlu0 %2693, %v1876
    %v2695 = vpop.permute.xlu0 %2694
    %2697 = vset.pattern.permute.xlu0 3
    %2698 = vperm.xlu0 %2697, %v1877
    %v2699 = vpop.permute.xlu0 %2698
    %2701 = vset.pattern.permute.xlu0 3
    %2702 = vperm.xlu0 %2701, %v1878
    %v2703 = vpop.permute.xlu0 %2702
    %2705 = vset.pattern.permute.xlu0 3
    %2706 = vperm.xlu0 %2705, %v1879
    %v2707 = vpop.permute.xlu0 %2706
    %2709 = vset.pattern.permute.xlu0 3
    %2710 = vperm.xlu0 %2709, %v1880
    %v2711 = vpop.permute.xlu0 %2710
    %2713 = vset.pattern.permute.xlu0 3
    %2714 = vperm.xlu0 %2713, %v1881
    %v2715 = vpop.permute.xlu0 %2714
    %2717 = vset.pattern.permute.xlu0 3
    %2718 = vperm.xlu0 %2717, %v1882
    %v2719 = vpop.permute.xlu0 %2718
    %2721 = vset.pattern.permute.xlu0 3
    %2722 = vperm.xlu0 %2721, %v1883
    %v2723 = vpop.permute.xlu0 %2722
    %2725 = vset.pattern.permute.xlu0 3
    %2726 = vperm.xlu0 %2725, %v1884
    %v2727 = vpop.permute.xlu0 %2726
    %2729 = vset.pattern.permute.xlu0 3
    %2730 = vperm.xlu0 %2729, %v1885
    %v2731 = vpop.permute.xlu0 %2730
    %v2733 = vmul.f32 %v1748, %v2607
    %v2734 = vmul.f32 %v1749, %v2611
    %v2735 = vmul.f32 %v1750, %v2615
    %v2736 = vmul.f32 %v1751, %v2619
    %v2737 = vmul.f32 %v1752, %v2623
    %v2738 = vmul.f32 %v1753, %v2627
    %v2739 = vmul.f32 %v1754, %v2631
    %v2740 = vmul.f32 %v1755, %v2635
    %v2741 = vmul.f32 %v1756, %v2639
    %v2742 = vmul.f32 %v1757, %v2643
    %v2743 = vmul.f32 %v1758, %v2647
    %v2744 = vmul.f32 %v1759, %v2651
    %v2745 = vmul.f32 %v1760, %v2655
    %v2746 = vmul.f32 %v1761, %v2659
    %v2747 = vmul.f32 %v1762, %v2663
    %v2748 = vmul.f32 %v1763, %v2667
    %v2749 = vmul.f32 %v1764, %v2671
    %v2750 = vmul.f32 %v1765, %v2675
    %v2751 = vmul.f32 %v1766, %v2679
    %v2752 = vmul.f32 %v1767, %v2683
    %v2753 = vmul.f32 %v1768, %v2687
    %v2754 = vmul.f32 %v1769, %v2691
    %v2755 = vmul.f32 %v1770, %v2695
    %v2756 = vmul.f32 %v1771, %v2699
    %v2757 = vmul.f32 %v1772, %v2703
    %v2758 = vmul.f32 %v1773, %v2707
    %v2759 = vmul.f32 %v1774, %v2711
    %v2760 = vmul.f32 %v1775, %v2715
    %v2761 = vmul.f32 %v1776, %v2719
    %v2762 = vmul.f32 %v1777, %v2723
    %v2763 = vmul.f32 %v1778, %v2727
    %v2764 = vmul.f32 %v1779, %v2731
    %v2765 = vsel %vm833, %v2733, -inf
    %v2766 = vsel %vm833, %v2734, -inf
    %v2767 = vsel %vm833, %v2735, -inf
    %v2768 = vsel %vm833, %v2736, -inf
    %v2769 = vsel %vm833, %v2737, -inf
    %v2770 = vmax.f32 %v2765, %v2769
    %v2771 = vsel %vm833, %v2738, -inf
    %v2772 = vmax.f32 %v2766, %v2771
    %v2773 = vsel %vm833, %v2739, -inf
    %v2774 = vmax.f32 %v2767, %v2773
    %v2775 = vsel %vm833, %v2740, -inf
    %v2776 = vmax.f32 %v2768, %v2775
    %v2777 = vsel %vm833, %v2741, -inf
    %v2778 = vmax.f32 %v2770, %v2777
    %v2779 = vsel %vm833, %v2742, -inf
    %v2780 = vmax.f32 %v2772, %v2779
    %v2781 = vsel %vm833, %v2743, -inf
    %v2782 = vmax.f32 %v2774, %v2781
    %v2783 = vsel %vm833, %v2744, -inf
    %v2784 = vmax.f32 %v2776, %v2783
    %v2785 = vsel %vm833, %v2745, -inf
    %v2786 = vmax.f32 %v2778, %v2785
    %v2787 = vsel %vm833, %v2746, -inf
    %v2788 = vmax.f32 %v2780, %v2787
    %v2789 = vsel %vm833, %v2747, -inf
    %v2790 = vmax.f32 %v2782, %v2789
    %v2791 = vsel %vm833, %v2748, -inf
    %v2792 = vmax.f32 %v2784, %v2791
    %v2793 = vsel %vm833, %v2749, -inf
    %v2794 = vmax.f32 %v2786, %v2793
    %v2795 = vsel %vm833, %v2750, -inf
    %v2796 = vmax.f32 %v2788, %v2795
    %v2797 = vsel %vm833, %v2751, -inf
    %v2798 = vmax.f32 %v2790, %v2797
    %v2799 = vsel %vm833, %v2752, -inf
    %v2800 = vmax.f32 %v2792, %v2799
    %v2801 = vsel %vm833, %v2753, -inf
    %v2802 = vmax.f32 %v2794, %v2801
    %v2803 = vsel %vm833, %v2754, -inf
    %v2804 = vmax.f32 %v2796, %v2803
    %v2805 = vsel %vm833, %v2755, -inf
    %v2806 = vmax.f32 %v2798, %v2805
    %v2807 = vsel %vm833, %v2756, -inf
    %v2808 = vmax.f32 %v2800, %v2807
    %v2809 = vsel %vm833, %v2757, -inf
    %v2810 = vmax.f32 %v2802, %v2809
    %v2811 = vsel %vm833, %v2758, -inf
    %v2812 = vmax.f32 %v2804, %v2811
    %v2813 = vsel %vm833, %v2759, -inf
    %v2814 = vmax.f32 %v2806, %v2813
    %v2815 = vsel %vm833, %v2760, -inf
    %v2816 = vmax.f32 %v2808, %v2815
    %v2817 = vsel %vm833, %v2761, -inf
    %v2818 = vmax.f32 %v2810, %v2817
    %v2819 = vsel %vm833, %v2762, -inf
    %v2820 = vmax.f32 %v2812, %v2819
    %v2821 = vsel %vm833, %v2763, -inf
    %v2822 = vmax.f32 %v2814, %v2821
    %v2823 = vsel %vm833, %v2764, -inf
    %v2824 = vmax.f32 %v2816, %v2823
    %v2825 = vmax.f32 %v2818, %v2820
    %v2826 = vmax.f32 %v2822, %v2824
    %v2827 = vmax.f32 %v2825, %v2826
    %v2828 = vrot.slane %v2827, 4
    %v2829 = vmax.f32 %v2827, %v2828
    %v2830 = vrot.slane %v2829, 2
    %v2831 = vmax.f32 %v2829, %v2830
    %v2832 = vrot.slane %v2831, 1
    %v2833 = vmax.f32 %v2831, %v2832
    %vm2834 = vcmask 1040384
    %v2835 = vsel %vm2834, %v2146, %v2375
    %vm2836 = vcmask 1041408
    %v2837 = vsel %vm2836, %v2835, %v2604
    %vm2838 = vcmask 1042432
    %v2839 = vsel %vm2838, %v2837, %v2833
    %2841 = vrot.lane.b32.xlu0 %v1851, 64
    %v2842 = vpop.permute.xlu0 %2841
    %v2844 = vsel %vm833, %v2839, %v2842
    %2845 = vst [vmem:[#allocation3] sm:$0xf] %v2844
    %v2846 = vld [vmem:[%s10] sm:$0xff]
    %v2847 = vld [vmem:[%s10 + $0x8] sm:$0xff]
    %v2848 = vld [vmem:[%s10 + $0x10] sm:$0xff]
    %v2849 = vld [vmem:[%s10 + $0x18] sm:$0xff]
    %v2850 = vld [vmem:[%s10 + $0x20] sm:$0xff]
    %v2851 = vld [vmem:[%s10 + $0x28] sm:$0xff]
    %v2852 = vld [vmem:[%s10 + $0x30] sm:$0xff]
    %v2853 = vld [vmem:[%s10 + $0x38] sm:$0xff]
    %v2854 = vld [vmem:[%s10 + $0x40] sm:$0xff]
    %v2855 = vld [vmem:[%s10 + $0x48] sm:$0xff]
    %v2856 = vld [vmem:[%s10 + $0x50] sm:$0xff]
    %v2857 = vld [vmem:[%s10 + $0x58] sm:$0xff]
    %v2858 = vld [vmem:[%s10 + $0x60] sm:$0xff]
    %v2859 = vld [vmem:[%s10 + $0x68] sm:$0xff]
    %v2860 = vld [vmem:[%s10 + $0x70] sm:$0xff]
    %v2861 = vld [vmem:[%s10 + $0x78] sm:$0xff]
    %v2862 = vld [vmem:[#allocation2] sm:$0x1]
    %v2864 = vlaneseq
    %v2865 = vshrl.u32 %v2864, 7
    %v2866 = vsub.s32 0, %v2865
    %v2867 = vrot.slane %v2862, %v2866
    %2869 = vmatprep.subr.mxu0 0.0
    %2870 = vmatpush1.msra.mxu0 %v2861
    %2871 = vmatprep.subr.mxu0 0.0
    %2872 = vmatpush1.msra.mxu0 %v2860
    %2873 = vmatprep.subr.mxu0 0.0
    %2874 = vmatpush1.msra.mxu0 %v2859
    %2875 = vmatprep.subr.mxu0 0.0
    %2876 = vmatpush1.msra.mxu0 %v2858
    %2877 = vmatprep.subr.mxu0 0.0
    %2878 = vmatpush1.msra.mxu0 %v2857
    %2879 = vmatprep.subr.mxu0 0.0
    %2880 = vmatpush1.msra.mxu0 %v2856
    %2881 = vmatprep.subr.mxu0 0.0
    %2882 = vmatpush1.msra.mxu0 %v2855
    %2883 = vmatprep.subr.mxu0 0.0
    %2884 = vmatpush1.msra.mxu0 %v2854
    %2885 = vmatprep.subr.mxu0 0.0
    %2886 = vmatpush1.msra.mxu0 %v2853
    %2887 = vmatprep.subr.mxu0 0.0
    %2888 = vmatpush1.msra.mxu0 %v2852
    %2889 = vmatprep.subr.mxu0 0.0
    %2890 = vmatpush1.msra.mxu0 %v2851
    %2891 = vmatprep.subr.mxu0 0.0
    %2892 = vmatpush1.msra.mxu0 %v2850
    %2893 = vmatprep.subr.mxu0 0.0
    %2894 = vmatpush1.msra.mxu0 %v2849
    %2895 = vmatprep.subr.mxu0 0.0
    %2896 = vmatpush1.msra.mxu0 %v2848
    %2897 = vmatprep.subr.mxu0 0.0
    %2898 = vmatpush1.msra.mxu0 %v2847
    %2899 = vmatprep.subr.mxu0 0.0
    %2900 = vmatpush1.msra.mxu0 %v2846
    %2901 = vmatprep.subr.mxu0 0.0
    %2902 = vmatpush2.msra.mxu0 0.0
    %2903 = vmatprep.subr.mxu0 0.0
    %2904 = vmatpush2.msra.mxu0 0.0
    %2905 = vmatprep.subr.mxu0 0.0
    %2906 = vmatpush2.msra.mxu0 0.0
    %2907 = vmatprep.subr.mxu0 0.0
    %2908 = vmatpush2.msra.mxu0 0.0
    %2909 = vmatprep.subr.mxu0 0.0
    %2910 = vmatpush2.msra.mxu0 0.0
    %2911 = vmatprep.subr.mxu0 0.0
    %2912 = vmatpush2.msra.mxu0 0.0
    %2913 = vmatprep.subr.mxu0 0.0
    %2914 = vmatpush2.msra.mxu0 0.0
    %2915 = vmatprep.subr.mxu0 0.0
    %2916 = vmatpush2.msra.mxu0 0.0
    %2917 = vmatprep.subr.mxu0 0.0
    %2918 = vmatpush2.msra.mxu0 0.0
    %2919 = vmatprep.subr.mxu0 0.0
    %2920 = vmatpush2.msra.mxu0 0.0
    %2921 = vmatprep.subr.mxu0 0.0
    %2922 = vmatpush2.msra.mxu0 0.0
    %2923 = vmatprep.subr.mxu0 0.0
    %2924 = vmatpush2.msra.mxu0 0.0
    %2925 = vmatprep.subr.mxu0 0.0
    %2926 = vmatpush2.msra.mxu0 0.0
    %2927 = vmatprep.subr.mxu0 0.0
    %2928 = vmatpush2.msra.mxu0 0.0
    %2929 = vmatprep.subr.mxu0 0.0
    %2930 = vmatpush2.msra.mxu0 0.0
    %2931 = vmatprep.subr.mxu0 0.0
    %2932 = vmatpush2.msra.mxu0 0.0
    %2933 = vmatprep.mubr.f32.mxu0 0.0
    %2934 = vmatmul.mubr.f32.gmra.mxu0 %v2844
    %v2935 = vpop.f32.mrf.mxu0
    %v2936 = vadd.f32 %v2867, %v2935
    %v2937 = vpop.f32.mrf.mxu0
    %2938 = vdwg.mxu0
    %v2939 = vsub.f32 0.0, %v2936
    %v2940 = vmul.f32 %v2939, 1.442695
    %v2941 = vpow.pop %v2940
    %v2942 = vadd.f32 %v2941, 1.0
    %v2943 = vrcp.pop %v2942
    %v2944 = vmul.f32 1.0, %v2943
    %vm2945 = vcmask 3072
    %2946 = vst.msk [vmem:[%s12] sm:$0xf] %vm2945, %v2944
    // Predicated region
    $region50: #{_lambda_.1} parent=1 // pred_check
      _
    $region51: #{_lambda_.1} parent=1 // pred_check_branch
      %2948 = sbr.rel (0) target = $region53
    $region52: #{_lambda_.1} parent=1 // pred_region
      _
    $region53: #{_lambda_.1} parent=1 // pred_fallthru
      _
    // Predicated region
    $region54: #{_lambda_.1} parent=1 // pred_check
      _
    $region55: #{_lambda_.1} parent=1 // pred_check_branch
      %2950 = sbr.rel (0) target = $region57
    $region56: #{_lambda_.1} parent=1 // pred_region
      %s2952 = ssub.s32 64, 64
      %2953 = vsyncadd [#allocation4], %s2952
      %s2955 = sshll.u32 [#allocation3], 4
      %s2956 = int_to_ptr.vmem [resolvable:$true] %s2955
      %2958 = dma.vmem_to_hbm [thread:$0]  %s2956, 64, %s13, [#allocation4]
    $region57: #{_lambda_.1} parent=1 // pred_fallthru
      _
    // Predicated region
    $region58: #{_lambda_.1} parent=1 // pred_check
      _
    $region59: #{_lambda_.1} parent=1 // pred_check_branch
      %2960 = sbr.rel (0) target = $region61
    $region60: #{_lambda_.1} parent=1 // pred_region
      _
    $region61: #{_lambda_.1} parent=1 // pred_fallthru
      _
    // Predicated region
    $region62: #{_lambda_.1} parent=1 // pred_check
      _
    $region63: #{_lambda_.1} parent=1 // pred_check_branch
      %2962 = sbr.rel (0) target = $region65
    $region64: #{_lambda_.1} parent=1 // pred_region
      %2963 = dma.done [#allocation4], 64
    $region65: #{_lambda_.1} parent=1 // pred_fallthru
      _
    %2964 = vsyncpa [#allocation4], 1

</llo_original>
